<compile_context>
chip_gen: v7x
topology: tpu7x:2x2x1
jax: 0.10.0
libtpu: 0.0.40
codegen_flags: <defaults>
</compile_context>

<pallas_src>
import functools

import jax
import jax.numpy as jnp
from jax.experimental import pallas as pl
from jax.experimental.pallas import tpu as pltpu


# ---------------------------------------------------------------------------
# small helpers
# ---------------------------------------------------------------------------
def _round_up(x, m):
    return ((x + m - 1) // m) * m


def _pick_tile(dim, target, align):
    """Tile size for a dim that will be padded to a multiple of `align`.
    Prefers a divisor of the aligned dim in [target/2, target]; otherwise
    returns `target` and the caller pads the dim to a multiple of it."""
    d = _round_up(dim, align)
    t = max(align, (target // align) * align)
    if d <= t:
        return d
    s = t
    lo = max(align, t // 2)
    while s >= lo:
        if d % s == 0:
            return s
        s -= align
    return t


def _pick_chunk(dim, target):
    """Largest divisor of dim that is <= target."""
    target = max(1, int(target))
    if dim <= target:
        return dim
    for t in range(target, 0, -1):
        if dim % t == 0:
            return t
    return dim


def _vmem_capacity_bytes():
    """Physical VMEM per core (v5e/v6e: 128 MiB, v7x: 64 MiB).  Conservative
    default of 64 MiB if the query is unavailable."""
    try:
        info = pltpu.get_tpu_info()
        cap = int(getattr(info, "vmem_capacity_bytes", 0))
        if cap > 0:
            return cap
    except Exception:
        pass
    return 64 * 1024 * 1024


def _num_tensorcores():
    """Best-effort TensorCore-per-chip count (v7x has 2)."""
    try:
        d = jax.devices()[0]
        n = getattr(d, "num_cores", None)
        if n:
            return int(n)
        kind = str(getattr(d, "device_kind", "")).lower()
        return 2 if "v7" in kind else 1
    except Exception:
        return 1


def _vmem_limit(est_bytes, cap_bytes):
    # generous headroom (compiler-internal scratch, block padding), clamped to
    # ~90% of physical VMEM so we never request more than the chip has.
    return int(min(max(2 * est_bytes + (2 << 20), 32 << 20),
                   int(cap_bytes * 0.9)))


# ---------------------------------------------------------------------------
# Tiled matmul + bias kernels (hoisted input projection and decoder).
# ---------------------------------------------------------------------------
def _matmul_bias_kernel_noacc(a_ref, b_ref, bias_ref, o_ref):
    # Whole K reduction in one tile: accumulate straight into the output, no
    # f32 scratch needed (saves TM*TN*4 bytes of grid-resident VMEM).
    o_ref[...] = (jnp.dot(a_ref[...], b_ref[...],
                          preferred_element_type=jnp.float32)
                  + bias_ref[...].astype(jnp.float32)).astype(o_ref.dtype)


def _matmul_bias_kernel_acc(a_ref, b_ref, bias_ref, o_ref, acc_ref):
    k = pl.program_id(2)

    @pl.when(k == 0)
    def _():
        acc_ref[...] = jnp.zeros_like(acc_ref)

    acc_ref[...] += jnp.dot(a_ref[...], b_ref[...],
                            preferred_element_type=jnp.float32)

    @pl.when(k == pl.num_programs(2) - 1)
    def _():
        o_ref[...] = (acc_ref[...]
                      + bias_ref[...].astype(jnp.float32)).astype(o_ref.dtype)


def matmul_bias(a, b, bias, *, out_dtype=jnp.bfloat16, tm=512, tn=512, tk=2048):
    """a: (N, K), b: (K, V), bias: (1, V) f32 -> (N, V) in out_dtype.

    Pads N to a multiple of 8 and V/K to multiples of 128 (bounded tiles even
    for vocabularies like 33278) and slices the result back."""
    N, K = a.shape
    Kb, V = b.shape
    assert K == Kb and bias.shape == (1, V)
    cap = _vmem_capacity_bytes()

    TM = _pick_tile(N, tm, 8)
    TN = _pick_tile(V, tn, 128)
    TK = _pick_tile(K, tk, 128)
    Np, Vp, Kp = _round_up(N, TM), _round_up(V, TN), _round_up(K, TK)

    a_p = a if (Np == N and Kp == K) else jnp.pad(a, ((0, Np - N), (0, Kp - K)))
    b_p = b if (Kp == K and Vp == V) else jnp.pad(b, ((0, Kp - K), (0, Vp - V)))
    bias_p = bias if Vp == V else jnp.pad(bias, ((0, 0), (0, Vp - V)))

    nk = Kp // TK
    abytes = jnp.dtype(a.dtype).itemsize
    bbytes = jnp.dtype(b.dtype).itemsize
    obytes = jnp.dtype(out_dtype).itemsize
    est = 2 * (TM * TK * abytes + TK * TN * bbytes + TN * 4 + TM * TN * obytes)
    if nk > 1:
        est += TM * TN * 4
    limit = _vmem_limit(est, cap)

    if nk == 1:
        grid_spec = pltpu.PrefetchScalarGridSpec(
            num_scalar_prefetch=0,
            grid=(Np // TM, Vp // TN),
            in_specs=[
                pl.BlockSpec((TM, TK), lambda i, j: (i, 0)),   # activations
                pl.BlockSpec((TK, TN), lambda i, j: (0, j)),   # weight
                pl.BlockSpec((1, TN), lambda i, j: (0, j)),    # bias
            ],
            out_specs=pl.BlockSpec((TM, TN), lambda i, j: (i, j)),
        )
        out = pl.pallas_call(
            _matmul_bias_kernel_noacc,
            out_shape=jax.ShapeDtypeStruct((Np, Vp), out_dtype),
            grid_spec=grid_spec,
            compiler_params=pltpu.CompilerParams(
                dimension_semantics=("parallel", "parallel"),
                vmem_limit_bytes=limit),
        )(a_p, b_p, bias_p)
    else:
        grid_spec = pltpu.PrefetchScalarGridSpec(
            num_scalar_prefetch=0,
            grid=(Np // TM, Vp // TN, nk),
            in_specs=[
                pl.BlockSpec((TM, TK), lambda i, j, k: (i, k)),
                pl.BlockSpec((TK, TN), lambda i, j, k: (k, j)),
                pl.BlockSpec((1, TN), lambda i, j, k: (0, j)),
            ],
            out_specs=pl.BlockSpec((TM, TN), lambda i, j, k: (i, j)),
            scratch_shapes=[pltpu.VMEM((TM, TN), jnp.float32)],
        )
        out = pl.pallas_call(
            _matmul_bias_kernel_acc,
            out_shape=jax.ShapeDtypeStruct((Np, Vp), out_dtype),
            grid_spec=grid_spec,
            compiler_params=pltpu.CompilerParams(
                dimension_semantics=("parallel", "parallel", "arbitrary"),
                vmem_limit_bytes=limit),
        )(a_p, b_p, bias_p)

    if Np != N or Vp != V:
        out = out[:N, :V]
    return out


# ---------------------------------------------------------------------------
# LSTM recurrence kernel: grid = (batch_blocks, S // SC); one S-chunk per grid
# step, h/c carried in VMEM scratch across chunks, W_hh resident in VMEM.
# PyTorch gate order: i, f, g, o ;  c' = f*c + i*g ; h' = o*tanh(c')
# gates_ref already contains x_t @ W_ih^T + (b_ih + b_hh) in bf16 (hoisted).
# ---------------------------------------------------------------------------
def _lstm_recurrence_kernel(gates_ref, whh_hbm, h0_ref, c0_ref,
                            y_ref, hn_ref, cn_ref,
                            whh_vmem, h_scr, c_scr, whh_sem, *, unroll):
    chunk = pl.program_id(1)

    @pl.when(chunk == 0)
    def _():
        # One-time (per batch block / per core) weight DMA, overlapped with
        # the h0/c0 initialization.  No double-buffering of a loop-invariant.
        cp = pltpu.make_async_copy(whh_hbm, whh_vmem, whh_sem)
        cp.start()
        h_scr[...] = h0_ref[...]
        c_scr[...] = c0_ref[...]
        cp.wait()

    sc = gates_ref.shape[0]
    H = h_scr.shape[1]
    whh = whh_vmem[...]                                # (H, 4H) bf16, resident

    def step(s, carry):
        h, c = carry                                   # f32 (Bblk, H)
        g = gates_ref[s].astype(jnp.float32) + jnp.dot(
            h.astype(whh.dtype), whh, preferred_element_type=jnp.float32)
        # TODO(synk): for H not a multiple of 128, pad each gate segment to a
        # 128-lane boundary in the weight layout so these slices stay
        # vreg-aligned (no-op for H=128 here).
        i_g = jax.nn.sigmoid(g[:, 0 * H:1 * H])
        f_g = jax.nn.sigmoid(g[:, 1 * H:2 * H])
        g_g = jnp.tanh(g[:, 2 * H:3 * H])
        o_g = jax.nn.sigmoid(g[:, 3 * H:4 * H])
        c_new = f_g * c + i_g * g_g
        h_new = o_g * jnp.tanh(c_new)
        y_ref[s] = h_new.astype(y_ref.dtype)
        return h_new, c_new

    h, c = jax.lax.fori_loop(0, sc, step, (h_scr[...], c_scr[...]),
                             unroll=unroll)
    h_scr[...] = h
    c_scr[...] = c

    @pl.when(chunk == pl.num_programs(1) - 1)
    def _():
        hn_ref[...] = h.astype(hn_ref.dtype)
        cn_ref[...] = c.astype(cn_ref.dtype)


def lstm_recurrence(gates, w_hh_t, h0, c0, *, chunk_target=None,
                    batch_blocks=None, unroll=4):
    """gates: (S, B, 4H) bf16 (precomputed x@W_ih^T + bias), w_hh_t: (H, 4H)
    bf16, h0/c0: (B, H) f32.  Returns y: (S, B, H) bf16, h_n/c_n: (B, H) f32."""
    S, B, G = gates.shape
    H = w_hh_t.shape[0]
    cap = _vmem_capacity_bytes()

    # Optional batch split: gives v7x's second TensorCore half the batch.
    if batch_blocks is None:
        batch_blocks = 2 if (_num_tensorcores() >= 2 and B % 16 == 0) else 1
    if batch_blocks < 1 or B % batch_blocks != 0 or \
            (batch_blocks > 1 and (B // batch_blocks) % 8 != 0):
        batch_blocks = 1
    Bblk = B // batch_blocks

    gbytes = jnp.dtype(gates.dtype).itemsize
    wbytes = jnp.dtype(w_hh_t.dtype).itemsize
    if chunk_target is None:
        # Size the chunk against this generation's VMEM (smaller on v7x).
        per_step = 2 * Bblk * G * gbytes + 2 * Bblk * H * 2   # gates + y (x2 buf)
        fixed = H * G * wbytes + 12 * Bblk * H * 4
        budget = int(cap * 0.4) - fixed
        chunk_target = max(1, min(64, budget // max(per_step, 1)))
    SC = _pick_chunk(S, chunk_target)

    est = (2 * SC * Bblk * G * gbytes        # gates chunk, double-buffered
           + 2 * SC * Bblk * H * 2           # y chunk (bf16), double-buffered
           + H * G * wbytes                  # resident W_hh
           + 12 * Bblk * H * 4)              # h0/c0/hn/cn buffers + h/c scratch
    limit = _vmem_limit(est, cap)

    grid_spec = pltpu.PrefetchScalarGridSpec(
        num_scalar_prefetch=0,
        grid=(batch_blocks, S // SC),
        in_specs=[
            pl.BlockSpec((SC, Bblk, G), lambda b, c: (c, b, 0)),  # gates chunk
            pl.BlockSpec(memory_space=pl.ANY),                    # W_hh in HBM
            pl.BlockSpec((Bblk, H), lambda b, c: (b, 0)),         # h0
            pl.BlockSpec((Bblk, H), lambda b, c: (b, 0)),         # c0
        ],
        out_specs=[
            pl.BlockSpec((SC, Bblk, H), lambda b, c: (c, b, 0)),  # y
            pl.BlockSpec((Bblk, H), lambda b, c: (b, 0)),         # h_n
            pl.BlockSpec((Bblk, H), lambda b, c: (b, 0)),         # c_n
        ],
        scratch_shapes=[
            pltpu.VMEM((H, G), w_hh_t.dtype),                     # resident W_hh
            pltpu.VMEM((Bblk, H), jnp.float32),                   # h carry
            pltpu.VMEM((Bblk, H), jnp.float32),                   # c carry
            pltpu.SemaphoreType.DMA(()),                          # W_hh DMA sem
        ],
    )
    kernel = functools.partial(_lstm_recurrence_kernel,
                               unroll=max(1, min(int(unroll), SC)))
    y, h_n, c_n = pl.pallas_call(
        kernel,
        out_shape=(
            jax.ShapeDtypeStruct((S, B, H), jnp.bfloat16),
            jax.ShapeDtypeStruct((B, H), jnp.float32),
            jax.ShapeDtypeStruct((B, H), jnp.float32),
        ),
        grid_spec=grid_spec,
        compiler_params=pltpu.CompilerParams(
            dimension_semantics=("parallel", "arbitrary"),
            vmem_limit_bytes=limit),
    )(gates, w_hh_t, h0, c0)
    return y, h_n, c_n


# ---------------------------------------------------------------------------
# Full model forward
# ---------------------------------------------------------------------------
def lstm_language_model_forward(tokens, hidden, params, *, chunk_target=None,
                                batch_blocks=None):
    """tokens: (S, B) int32; hidden: list of (h0, c0), each (1, B, H) f32.
    Returns (logits (S*B, ntoken) bf16, new_hidden list of (h, c) (1, B, H))."""
    # Embedding lookup is a gather (XLA glue); matmul hot paths are in Pallas.
    # TODO(synk): embedded_dropout / LockedDropout / WeightDrop are RNG ops
    # that are identity in eval mode; only eval-mode semantics implemented.
    emb = params["embedding"][tokens]                        # (S, B, ninp) bf16
    x = emb
    new_hidden = []
    for l, lp in enumerate(params["lstm_layers"]):
        S, B, D = x.shape
        H = lp["w_hh_t"].shape[0]
        # Hoisted input projection with fused bias, emitted in bf16 to halve
        # the (S, B, 4H) slab's HBM traffic and its VMEM footprint.
        gates_in = matmul_bias(x.reshape(S * B, D), lp["w_ih_t"], lp["bias"],
                               out_dtype=jnp.bfloat16, tm=512
                               ).reshape(S, B, 4 * H)
        h0 = hidden[l][0][0]                                 # (B, H)
        c0 = hidden[l][1][0]
        y, h_n, c_n = lstm_recurrence(gates_in, lp["w_hh_t"], h0, c0,
                                      chunk_target=chunk_target,
                                      batch_blocks=batch_blocks)
        x = y
        new_hidden.append((h_n[None], c_n[None]))
    S, B, H = x.shape
    # Decoder: large row tile so the (nhid, ntoken) weight is streamed few
    # times; bf16 logits (lane-dense stores, half the HBM write traffic).
    logits = matmul_bias(x.reshape(S * B, H), params["dec_w_t"],
                         params["dec_b"], out_dtype=jnp.bfloat16, tm=1024)
    return logits, new_hidden


# ---------------------------------------------------------------------------
# Deterministic parameter construction (mirrors module __init__ shapes)
# ---------------------------------------------------------------------------
def init_params(key, ntoken, ninp, nhid, nlayers):
    keys = jax.random.split(key, 2 + 4 * nlayers)
    initrange = 0.1
    params = {
        "embedding": jax.random.uniform(keys[0], (ntoken, ninp), jnp.float32,
                                        -initrange, initrange
                                        ).astype(jnp.bfloat16),
        "dec_w_t": jax.random.uniform(keys[1], (nhid, ntoken), jnp.float32,
                                      -initrange, initrange
                                      ).astype(jnp.bfloat16),
        "dec_b": jnp.zeros((1, ntoken), jnp.float32),
        "lstm_layers": [],
    }
    for l in range(nlayers):
        in_dim = ninp if l == 0 else nhid
        out_dim = nhid                                      # tie_weights=False
        std = 1.0 / float(out_dim) ** 0.5
        k = keys[2 + 4 * l: 2 + 4 * (l + 1)]
        w_ih = jax.random.uniform(k[0], (4 * out_dim, in_dim), jnp.float32, -std, std)
        w_hh = jax.random.uniform(k[1], (4 * out_dim, out_dim), jnp.float32, -std, std)
        b_ih = jax.random.uniform(k[2], (4 * out_dim,), jnp.float32, -std, std)
        b_hh = jax.random.uniform(k[3], (4 * out_dim,), jnp.float32, -std, std)
        params["lstm_layers"].append({
            "w_ih_t": w_ih.T.astype(jnp.bfloat16),          # (in_dim, 4H)
            "w_hh_t": w_hh.T.astype(jnp.bfloat16),          # (H, 4H)
            "bias": (b_ih + b_hh)[None, :],                 # (1, 4H) f32, fused
        })
    return params


# ---------------------------------------------------------------------------
# Pure-JAX f32 reference (uses the same bf16 weights, math in f32)
# ---------------------------------------------------------------------------
def _ref_forward(tokens, hidden, params):
    emb = params["embedding"].astype(jnp.float32)[tokens]
    x = emb
    new_hidden = []
    for l, lp in enumerate(params["lstm_layers"]):
        h = hidden[l][0][0]
        c = hidden[l][1][0]
        H = h.shape[1]
        wih = lp["w_ih_t"].astype(jnp.float32)
        whh = lp["w_hh_t"].astype(jnp.float32)
        b = lp["bias"]
        ys = []
        for t in range(x.shape[0]):
            g = x[t] @ wih + h @ whh + b
            i = jax.nn.sigmoid(g[:, :H])
            f = jax.nn.sigmoid(g[:, H:2 * H])
            gg = jnp.tanh(g[:, 2 * H:3 * H])
            o = jax.nn.sigmoid(g[:, 3 * H:])
            c = f * c + i * gg
            h = o * jnp.tanh(c)
            ys.append(h)
        x = jnp.stack(ys)
        new_hidden.append((h[None], c[None]))
    S, B, H = x.shape
    res = x.reshape(S * B, H) @ params["dec_w_t"].astype(jnp.float32) + params["dec_b"]
    return res, new_hidden


if __name__ == "__main__":
    # Small config consistent with the module.  S > chunk_target so the
    # multi-chunk h/c carry and resident-W_hh paths are exercised, and
    # batch_blocks=2 exercises the batch-split grid axis (correct on 1 or 2
    # TensorCores).
    ntoken, ninp, nhid, nlayers = 256, 128, 128, 2
    S, B = 24, 16

    key = jax.random.PRNGKey(0)
    kp, kt = jax.random.split(key)
    params = init_params(kp, ntoken, ninp, nhid, nlayers)
    tokens = jax.random.randint(kt, (S, B), 0, ntoken, dtype=jnp.int32)

    # init_hidden(bsz): zeros, shape (1, B, nhid) per layer (tie_weights=False)
    hidden = [(jnp.zeros((1, B, nhid), jnp.float32),
               jnp.zeros((1, B, nhid), jnp.float32)) for _ in range(nlayers)]

    result, new_hidden = lstm_language_model_forward(
        tokens, hidden, params, chunk_target=8, batch_blocks=2)
    jax.block_until_ready(result)
    for h, c in new_hidden:
        jax.block_until_ready(h)
        jax.block_until_ready(c)

    # Sanity check against pure-JAX reference (bf16 gates/activations/logits
    # in the kernel path -> loosened tolerance).
    ref_res, ref_hidden = _ref_forward(tokens, hidden, params)
    assert result.shape == (S * B, ntoken)
    assert jnp.allclose(result.astype(jnp.float32), ref_res,
                        atol=4e-2, rtol=4e-2)
    for (h, c), (rh, rc) in zip(new_hidden, ref_hidden):
        assert h.shape == (1, B, nhid) and c.shape == (1, B, nhid)
        assert jnp.allclose(h, rh, atol=4e-2, rtol=4e-2)
        assert jnp.allclose(c, rc, atol=4e-2, rtol=4e-2)

    # Extra check: exercise the K-reduction (accumulator) matmul path, which
    # the model config above does not hit (K always fits one tile there).
    ka, kb = jax.random.split(jax.random.PRNGKey(1))
    a_t = jax.random.normal(ka, (64, 256), jnp.float32).astype(jnp.bfloat16)
    b_t = jax.random.normal(kb, (256, 128), jnp.float32).astype(jnp.bfloat16)
    bias_t = jnp.zeros((1, 128), jnp.float32)
    out_t = matmul_bias(a_t, b_t, bias_t, out_dtype=jnp.float32, tk=128)
    jax.block_until_ready(out_t)
    ref_t = a_t.astype(jnp.float32) @ b_t.astype(jnp.float32)
    assert jnp.allclose(out_t, ref_t, atol=1e-2, rtol=1e-2)

    print("KERNEL_OK")
</pallas_src>

<mosaic_0001>
module attributes {stable_mosaic.version = 11 : i64} {
  func.func @_matmul_bias_kernel_noacc(%arg0: i32, %arg1: i32, %arg2: memref<384x128xbf16, #tpu.memory_space<vmem>>, %arg3: memref<128x512xbf16, #tpu.memory_space<vmem>>, %arg4: memref<1x512xf32, #tpu.memory_space<vmem>>, %arg5: memref<384x512xbf16, #tpu.memory_space<vmem>>) attributes {dimension_semantics = [#tpu.dimension_semantics<parallel>, #tpu.dimension_semantics<parallel>], iteration_bounds = array<i64: 1, 1>, scalar_prefetch = 0 : i64, scratch_operands = 0 : i64, tpu.core_type = #tpu.core_type<tc>, window_params = [{transform_indices = @transform_0, window_bounds = array<i64: 384, 128>}, {transform_indices = @transform_1, window_bounds = array<i64: 128, 512>}, {transform_indices = @transform_2, window_bounds = array<i64: 1, 512>}, {transform_indices = @transform_3, window_bounds = array<i64: 384, 512>}]} {
    %c0 = arith.constant 0 : index
    %c0_0 = arith.constant 0 : index
    %0 = vector.load %arg2[%c0, %c0_0] : memref<384x128xbf16, #tpu.memory_space<vmem>>, vector<384x128xbf16>
    %c0_1 = arith.constant 0 : index
    %c0_2 = arith.constant 0 : index
    %1 = vector.load %arg3[%c0_1, %c0_2] : memref<128x512xbf16, #tpu.memory_space<vmem>>, vector<128x512xbf16>
    %cst = arith.constant dense<0.000000e+00> : vector<384x512xf32>
    %2 = tpu.matmul %0, %1, %cst {dimension_numbers = #tpu.dot_dimension_numbers<[1], [0], [0], [1], [0, 0, 1, 1], [], []>} : vector<384x128xbf16>, vector<128x512xbf16>, vector<384x512xf32> -> vector<384x512xf32>
    %c0_3 = arith.constant 0 : index
    %c0_4 = arith.constant 0 : index
    %3 = vector.load %arg4[%c0_3, %c0_4] : memref<1x512xf32, #tpu.memory_space<vmem>>, vector<1x512xf32>
    %4 = vector.broadcast %3 : vector<1x512xf32> to vector<384x512xf32>
    %5 = arith.addf %2, %4 : vector<384x512xf32>
    %6 = arith.truncf %5 : vector<384x512xf32> to vector<384x512xbf16>
    %c0_5 = arith.constant 0 : index
    %c0_6 = arith.constant 0 : index
    %7 = vector.load %arg5[%c0_5, %c0_6] : memref<384x512xbf16, #tpu.memory_space<vmem>>, vector<384x512xbf16>
    tpu.vector_store %arg5[%c0_5, %c0_6], %6 {strides = array<i32>} : memref<384x512xbf16, #tpu.memory_space<vmem>>, vector<384x512xbf16>,
    return
  }
  func.func @transform_0(%arg0: i32, %arg1: i32) -> (i32, i32) {
    %c0_i32 = arith.constant 0 : i32
    %c0_i32_0 = arith.constant 0 : i32
    return %arg0, %c0_i32 : i32, i32
  }
  func.func @transform_1(%arg0: i32, %arg1: i32) -> (i32, i32) {
    %c0_i32 = arith.constant 0 : i32
    %c0_i32_0 = arith.constant 0 : i32
    return %c0_i32, %arg1 : i32, i32
  }
  func.func @transform_2(%arg0: i32, %arg1: i32) -> (i32, i32) {
    %c0_i32 = arith.constant 0 : i32
    %c0_i32_0 = arith.constant 0 : i32
    return %c0_i32, %arg1 : i32, i32
  }
  func.func @transform_3(%arg0: i32, %arg1: i32) -> (i32, i32) {
    %c0_i32 = arith.constant 0 : i32
    return %arg0, %arg1 : i32, i32
  }
}

</mosaic_0001>

<llo_original>
// kernel: tpu_custom_call.1
$region0: #{tpu_custom_call.1}
  #allocation0 [shape = 'u32[]', space=smem, size = 0x4, offset = 0x4, fixed_abs, tag = 'smem constant byte address 0x4 - core index']
  #allocation1 [shape = 'u32[144,128]{1,0:T(1,128)}', space=vmem, size = 0x12000, scoped, tag = 'internal scratch']
  %s0 = inlined_call_operand.hbm [shape: bf16[384,128], index: 0, kind: input, shape index: {}]
  %s1 = inlined_call_operand.hbm [shape: bf16[128,512], index: 1, kind: input, shape index: {}]
  %s2 = inlined_call_operand.vmem [shape: f32[1,512], index: 2, kind: input, shape index: {}]
  %s3 = inlined_call_operand.hbm [shape: bf16[384,512], index: 3, kind: output, shape index: {}]
  %s4 = sld [smem:[#allocation0]]
  $region30: #{tpu_custom_call.1} parent=0
    _
  %s6 = ssub.s32 1, %s4
  %s7 = scalar_select 0, %s6, %s4
  $region1: #{tpu_custom_call.1} parent=0
    #allocation2 [shape = 'u8[98304]{0}', space=vmem, size = 0x18000, scoped, tag = 'input window, operand 0, single buffered']
    #allocation3 [shape = 's32[1]{0}', space=sflag, size = 0x4, scoped, tag = 'scoped memory for tpu_custom_call.1']
    #allocation4 [shape = 's32[1]{0}', space=sflag, size = 0x4, scoped, tag = 'scoped memory for tpu_custom_call.1']
    #allocation5 [shape = 'u8[131072]{0}', space=vmem, size = 0x20000, scoped, tag = 'input window, operand 1, single buffered']
    #allocation6 [shape = 's32[1]{0}', space=sflag, size = 0x4, scoped, tag = 'scoped memory for tpu_custom_call.1']
    #allocation7 [shape = 'u8[393216]{0}', space=vmem, size = 0x60000, scoped, tag = 'output window, operand 0, single buffered']
    %8 = vsyncpa [#allocation3], 0
    %9 = vsyncpa [#allocation6], 0
    %10 = vsyncpa [#allocation4], 0
    // Predicated region
    $region2: #{tpu_custom_call.1} parent=1 // pred_check
      _
    $region3: #{tpu_custom_call.1} parent=1 // pred_check_branch
      %12 = sbr.rel (0) target = $region5
    $region4: #{tpu_custom_call.1} parent=1 // pred_region
      %s14 = ssub.s32 3072, 3072
      %15 = vsyncadd [#allocation3], %s14
      %s16 = sshll.u32 [#allocation2], 4
      %s17 = int_to_ptr.vmem [resolvable:$true] %s16
      %22 = dma.hbm_to_vmem [thread:$0]  %s0, 3072, %s17, [#allocation3], 64, 64, 4
    $region5: #{tpu_custom_call.1} parent=1 // pred_fallthru
      _
    // Predicated region
    $region6: #{tpu_custom_call.1} parent=1 // pred_check
      _
    $region7: #{tpu_custom_call.1} parent=1 // pred_check_branch
      %24 = sbr.rel (0) target = $region9
    $region8: #{tpu_custom_call.1} parent=1 // pred_region
      %s26 = ssub.s32 4096, 4096
      %27 = vsyncadd [#allocation6], %s26
      %s28 = sshll.u32 [#allocation5], 4
      %s29 = int_to_ptr.vmem [resolvable:$true] %s28
      %34 = dma.hbm_to_vmem [thread:$0]  %s1, 4096, %s29, [#allocation6], 256, 256, 16
    $region9: #{tpu_custom_call.1} parent=1 // pred_fallthru
      _
    // Predicated region
    $region10: #{tpu_custom_call.1} parent=1 // pred_check
      _
    $region11: #{tpu_custom_call.1} parent=1 // pred_check_branch
      %36 = sbr.rel (0) target = $region13
    $region12: #{tpu_custom_call.1} parent=1 // pred_region
      _
    $region13: #{tpu_custom_call.1} parent=1 // pred_fallthru
      _
    // Predicated region
    $region14: #{tpu_custom_call.1} parent=1 // pred_check
      _
    $region15: #{tpu_custom_call.1} parent=1 // pred_check_branch
      %38 = sbr.rel (0) target = $region17
    $region16: #{tpu_custom_call.1} parent=1 // pred_region
      %39 = dma.done [#allocation3], 3072
    $region17: #{tpu_custom_call.1} parent=1 // pred_fallthru
      _
    // Predicated region
    $region18: #{tpu_custom_call.1} parent=1 // pred_check
      _
    $region19: #{tpu_custom_call.1} parent=1 // pred_check_branch
      %41 = sbr.rel (0) target = $region21
    $region20: #{tpu_custom_call.1} parent=1 // pred_region
      %42 = dma.done [#allocation6], 4096
    $region21: #{tpu_custom_call.1} parent=1 // pred_fallthru
      _
    %v44 = vld [vmem:[#allocation2] sm:$0xf]
    %v45 = vld [vmem:[#allocation2 + $0x4] sm:$0xf]
    %v46 = vld [vmem:[#allocation2 + $0x8] sm:$0xf]
    %v47 = vld [vmem:[#allocation2 + $0xc] sm:$0xf]
    %v48 = vld [vmem:[#allocation2 + $0x10] sm:$0xf]
    %v49 = vld [vmem:[#allocation2 + $0x14] sm:$0xf]
    %v50 = vld [vmem:[#allocation2 + $0x18] sm:$0xf]
    %v51 = vld [vmem:[#allocation2 + $0x1c] sm:$0xf]
    %v52 = vld [vmem:[#allocation2 + $0x20] sm:$0xf]
    %v53 = vld [vmem:[#allocation2 + $0x24] sm:$0xf]
    %v54 = vld [vmem:[#allocation2 + $0x28] sm:$0xf]
    %v55 = vld [vmem:[#allocation2 + $0x2c] sm:$0xf]
    %v56 = vld [vmem:[#allocation2 + $0x30] sm:$0xf]
    %v57 = vld [vmem:[#allocation2 + $0x34] sm:$0xf]
    %v58 = vld [vmem:[#allocation2 + $0x38] sm:$0xf]
    %v59 = vld [vmem:[#allocation2 + $0x3c] sm:$0xf]
    %v60 = vld [vmem:[#allocation2 + $0x40] sm:$0xf]
    %v61 = vld [vmem:[#allocation2 + $0x44] sm:$0xf]
    %v62 = vld [vmem:[#allocation2 + $0x48] sm:$0xf]
    %v63 = vld [vmem:[#allocation2 + $0x4c] sm:$0xf]
    %v64 = vld [vmem:[#allocation2 + $0x50] sm:$0xf]
    %v65 = vld [vmem:[#allocation2 + $0x54] sm:$0xf]
    %v66 = vld [vmem:[#allocation2 + $0x58] sm:$0xf]
    %v67 = vld [vmem:[#allocation2 + $0x5c] sm:$0xf]
    %v68 = vld [vmem:[#allocation2 + $0x60] sm:$0xf]
    %v69 = vld [vmem:[#allocation2 + $0x64] sm:$0xf]
    %v70 = vld [vmem:[#allocation2 + $0x68] sm:$0xf]
    %v71 = vld [vmem:[#allocation2 + $0x6c] sm:$0xf]
    %v72 = vld [vmem:[#allocation2 + $0x70] sm:$0xf]
    %v73 = vld [vmem:[#allocation2 + $0x74] sm:$0xf]
    %v74 = vld [vmem:[#allocation2 + $0x78] sm:$0xf]
    %v75 = vld [vmem:[#allocation2 + $0x7c] sm:$0xf]
    %v76 = vld [vmem:[#allocation2 + $0x80] sm:$0xf]
    %v77 = vld [vmem:[#allocation2 + $0x84] sm:$0xf]
    %v78 = vld [vmem:[#allocation2 + $0x88] sm:$0xf]
    %v79 = vld [vmem:[#allocation2 + $0x8c] sm:$0xf]
    %v80 = vld [vmem:[#allocation2 + $0x90] sm:$0xf]
    %v81 = vld [vmem:[#allocation2 + $0x94] sm:$0xf]
    %v82 = vld [vmem:[#allocation2 + $0x98] sm:$0xf]
    %v83 = vld [vmem:[#allocation2 + $0x9c] sm:$0xf]
    %v84 = vld [vmem:[#allocation2 + $0xa0] sm:$0xf]
    %v85 = vld [vmem:[#allocation2 + $0xa4] sm:$0xf]
    %v86 = vld [vmem:[#allocation2 + $0xa8] sm:$0xf]
    %v87 = vld [vmem:[#allocation2 + $0xac] sm:$0xf]
    %v88 = vld [vmem:[#allocation2 + $0xb0] sm:$0xf]
    %v89 = vld [vmem:[#allocation2 + $0xb4] sm:$0xf]
    %v90 = vld [vmem:[#allocation2 + $0xb8] sm:$0xf]
    %v91 = vld [vmem:[#allocation2 + $0xbc] sm:$0xf]
    %v92 = vld [vmem:[#allocation5] sm:$0xff]
    %v93 = vld [vmem:[#allocation5 + $0x8] sm:$0xff]
    %v94 = vld [vmem:[#allocation5 + $0x10] sm:$0xff]
    %v95 = vld [vmem:[#allocation5 + $0x18] sm:$0xff]
    %v96 = vld [vmem:[#allocation5 + $0x20] sm:$0xff]
    %v97 = vld [vmem:[#allocation5 + $0x28] sm:$0xff]
    %v98 = vld [vmem:[#allocation5 + $0x30] sm:$0xff]
    %v99 = vld [vmem:[#allocation5 + $0x38] sm:$0xff]
    %v100 = vld [vmem:[#allocation5 + $0x40] sm:$0xff]
    %v101 = vld [vmem:[#allocation5 + $0x48] sm:$0xff]
    %v102 = vld [vmem:[#allocation5 + $0x50] sm:$0xff]
    %v103 = vld [vmem:[#allocation5 + $0x58] sm:$0xff]
    %v104 = vld [vmem:[#allocation5 + $0x60] sm:$0xff]
    %v105 = vld [vmem:[#allocation5 + $0x68] sm:$0xff]
    %v106 = vld [vmem:[#allocation5 + $0x70] sm:$0xff]
    %v107 = vld [vmem:[#allocation5 + $0x78] sm:$0xff]
    %v108 = vld [vmem:[#allocation5 + $0x80] sm:$0xff]
    %v109 = vld [vmem:[#allocation5 + $0x88] sm:$0xff]
    %v110 = vld [vmem:[#allocation5 + $0x90] sm:$0xff]
    %v111 = vld [vmem:[#allocation5 + $0x98] sm:$0xff]
    %v112 = vld [vmem:[#allocation5 + $0xa0] sm:$0xff]
    %v113 = vld [vmem:[#allocation5 + $0xa8] sm:$0xff]
    %v114 = vld [vmem:[#allocation5 + $0xb0] sm:$0xff]
    %v115 = vld [vmem:[#allocation5 + $0xb8] sm:$0xff]
    %v116 = vld [vmem:[#allocation5 + $0xc0] sm:$0xff]
    %v117 = vld [vmem:[#allocation5 + $0xc8] sm:$0xff]
    %v118 = vld [vmem:[#allocation5 + $0xd0] sm:$0xff]
    %v119 = vld [vmem:[#allocation5 + $0xd8] sm:$0xff]
    %v120 = vld [vmem:[#allocation5 + $0xe0] sm:$0xff]
    %v121 = vld [vmem:[#allocation5 + $0xe8] sm:$0xff]
    %v122 = vld [vmem:[#allocation5 + $0xf0] sm:$0xff]
    %v123 = vld [vmem:[#allocation5 + $0xf8] sm:$0xff]
    %v124 = vld [vmem:[%s2] sm:$0xf]
    %v126 = vlaneseq
    %v127 = vshrl.u32 %v126, 7
    %v128 = vsub.s32 0, %v127
    %v129 = vrot.slane %v124, %v128
    %v130 = vlaneseq
    %v131 = vshrl.u32 %v130, 7
    %v132 = vsub.s32 1, %v131
    %v133 = vrot.slane %v124, %v132
    %v134 = vlaneseq
    %v135 = vshrl.u32 %v134, 7
    %v136 = vsub.s32 2, %v135
    %v137 = vrot.slane %v124, %v136
    %v138 = vlaneseq
    %v139 = vshrl.u32 %v138, 7
    %v140 = vsub.s32 3, %v139
    %v141 = vrot.slane %v124, %v140
    %v194 = vunpack.c.l.b16 %v44
    %v195 = vunpack.c.l.b16 %v45
    %v196 = vunpack.c.l.b16 %v46
    %v197 = vunpack.c.l.b16 %v47
    %v198 = vunpack.c.l.b16 %v48
    %v199 = vunpack.c.l.b16 %v49
    %v200 = vunpack.c.l.b16 %v50
    %v201 = vunpack.c.l.b16 %v51
    %v202 = vunpack.c.l.b16 %v52
    %v203 = vunpack.c.l.b16 %v53
    %v204 = vunpack.c.l.b16 %v54
    %v205 = vunpack.c.l.b16 %v55
    %v206 = vunpack.c.l.b16 %v56
    %v207 = vunpack.c.l.b16 %v57
    %v208 = vunpack.c.l.b16 %v58
    %v209 = vunpack.c.l.b16 %v59
    %v210 = vunpack.c.l.b16 %v60
    %v211 = vunpack.c.l.b16 %v61
    %v212 = vunpack.c.l.b16 %v62
    %v213 = vunpack.c.l.b16 %v63
    %v214 = vunpack.c.l.b16 %v64
    %v215 = vunpack.c.l.b16 %v65
    %v216 = vunpack.c.l.b16 %v66
    %v217 = vunpack.c.l.b16 %v67
    %v218 = vunpack.c.l.b16 %v68
    %v219 = vunpack.c.l.b16 %v69
    %v220 = vunpack.c.l.b16 %v70
    %v221 = vunpack.c.l.b16 %v71
    %v222 = vunpack.c.l.b16 %v72
    %v223 = vunpack.c.l.b16 %v73
    %v224 = vunpack.c.l.b16 %v74
    %v225 = vunpack.c.l.b16 %v75
    %v226 = vunpack.c.l.b16 %v76
    %v227 = vunpack.c.l.b16 %v77
    %v228 = vunpack.c.l.b16 %v78
    %v229 = vunpack.c.l.b16 %v79
    %v230 = vunpack.c.l.b16 %v80
    %v231 = vunpack.c.l.b16 %v81
    %v232 = vunpack.c.l.b16 %v82
    %v233 = vunpack.c.l.b16 %v83
    %v234 = vunpack.c.l.b16 %v84
    %v235 = vunpack.c.l.b16 %v85
    %v236 = vunpack.c.l.b16 %v86
    %v237 = vunpack.c.l.b16 %v87
    %v238 = vunpack.c.l.b16 %v88
    %v239 = vunpack.c.l.b16 %v89
    %v240 = vunpack.c.l.b16 %v90
    %v241 = vunpack.c.l.b16 %v91
    %v242 = vpack.c.b16 %v195, %v194
    %v243 = vpack.c.b16 %v197, %v196
    %v244 = vpack.c.b16 %v199, %v198
    %v245 = vpack.c.b16 %v201, %v200
    %v246 = vpack.c.b16 %v203, %v202
    %v247 = vpack.c.b16 %v205, %v204
    %v248 = vpack.c.b16 %v207, %v206
    %v249 = vpack.c.b16 %v209, %v208
    %v250 = vpack.c.b16 %v211, %v210
    %v251 = vpack.c.b16 %v213, %v212
    %v252 = vpack.c.b16 %v215, %v214
    %v253 = vpack.c.b16 %v217, %v216
    %v254 = vpack.c.b16 %v219, %v218
    %v255 = vpack.c.b16 %v221, %v220
    %v256 = vpack.c.b16 %v223, %v222
    %v257 = vpack.c.b16 %v225, %v224
    %v258 = vpack.c.b16 %v227, %v226
    %v259 = vpack.c.b16 %v229, %v228
    %v260 = vpack.c.b16 %v231, %v230
    %v261 = vpack.c.b16 %v233, %v232
    %v262 = vpack.c.b16 %v235, %v234
    %v263 = vpack.c.b16 %v237, %v236
    %v264 = vpack.c.b16 %v239, %v238
    %v265 = vpack.c.b16 %v241, %v240
    %v322 = vunpack.c.l.b16 %v92
    %v323 = vunpack.c.h.b16 %v92
    %v324 = vunpack.c.l.b16 %v93
    %v325 = vunpack.c.h.b16 %v93
    %v326 = vunpack.c.l.b16 %v94
    %v327 = vunpack.c.h.b16 %v94
    %v328 = vunpack.c.l.b16 %v95
    %v329 = vunpack.c.h.b16 %v95
    %v330 = vunpack.c.l.b16 %v96
    %v331 = vunpack.c.h.b16 %v96
    %v332 = vunpack.c.l.b16 %v97
    %v333 = vunpack.c.h.b16 %v97
    %v334 = vunpack.c.l.b16 %v98
    %v335 = vunpack.c.h.b16 %v98
    %v336 = vunpack.c.l.b16 %v99
    %v337 = vunpack.c.h.b16 %v99
    %v338 = vunpack.c.l.b16 %v100
    %v339 = vunpack.c.h.b16 %v100
    %v340 = vunpack.c.l.b16 %v101
    %v341 = vunpack.c.h.b16 %v101
    %v342 = vunpack.c.l.b16 %v102
    %v343 = vunpack.c.h.b16 %v102
    %v344 = vunpack.c.l.b16 %v103
    %v345 = vunpack.c.h.b16 %v103
    %v346 = vunpack.c.l.b16 %v104
    %v347 = vunpack.c.h.b16 %v104
    %v348 = vunpack.c.l.b16 %v105
    %v349 = vunpack.c.h.b16 %v105
    %v350 = vunpack.c.l.b16 %v106
    %v351 = vunpack.c.h.b16 %v106
    %v352 = vunpack.c.l.b16 %v107
    %v353 = vunpack.c.h.b16 %v107
    %v354 = vunpack.c.l.b16 %v108
    %v355 = vunpack.c.h.b16 %v108
    %v356 = vunpack.c.l.b16 %v109
    %v357 = vunpack.c.h.b16 %v109
    %v358 = vunpack.c.l.b16 %v110
    %v359 = vunpack.c.h.b16 %v110
    %v360 = vunpack.c.l.b16 %v111
    %v361 = vunpack.c.h.b16 %v111
    %v362 = vunpack.c.l.b16 %v112
    %v363 = vunpack.c.h.b16 %v112
    %v364 = vunpack.c.l.b16 %v113
    %v365 = vunpack.c.h.b16 %v113
    %v366 = vunpack.c.l.b16 %v114
    %v367 = vunpack.c.h.b16 %v114
    %v368 = vunpack.c.l.b16 %v115
    %v369 = vunpack.c.h.b16 %v115
    %v370 = vunpack.c.l.b16 %v116
    %v371 = vunpack.c.h.b16 %v116
    %v372 = vunpack.c.l.b16 %v117
    %v373 = vunpack.c.h.b16 %v117
    %v374 = vunpack.c.l.b16 %v118
    %v375 = vunpack.c.h.b16 %v118
    %v376 = vunpack.c.l.b16 %v119
    %v377 = vunpack.c.h.b16 %v119
    %v378 = vunpack.c.l.b16 %v120
    %v379 = vunpack.c.h.b16 %v120
    %v380 = vunpack.c.l.b16 %v121
    %v381 = vunpack.c.h.b16 %v121
    %v382 = vunpack.c.l.b16 %v122
    %v383 = vunpack.c.h.b16 %v122
    %v384 = vunpack.c.l.b16 %v123
    %v385 = vunpack.c.h.b16 %v123
    %v386 = vpack.c.b16 %v326, %v322
    %v387 = vpack.c.b16 %v327, %v323
    %v388 = vpack.c.b16 %v328, %v324
    %v389 = vpack.c.b16 %v329, %v325
    %v390 = vpack.c.b16 %v334, %v330
    %v391 = vpack.c.b16 %v335, %v331
    %v392 = vpack.c.b16 %v336, %v332
    %v393 = vpack.c.b16 %v337, %v333
    %v394 = vpack.c.b16 %v342, %v338
    %v395 = vpack.c.b16 %v343, %v339
    %v396 = vpack.c.b16 %v344, %v340
    %v397 = vpack.c.b16 %v345, %v341
    %v398 = vpack.c.b16 %v350, %v346
    %v399 = vpack.c.b16 %v351, %v347
    %v400 = vpack.c.b16 %v352, %v348
    %v401 = vpack.c.b16 %v353, %v349
    %v402 = vpack.c.b16 %v358, %v354
    %v403 = vpack.c.b16 %v359, %v355
    %v404 = vpack.c.b16 %v360, %v356
    %v405 = vpack.c.b16 %v361, %v357
    %v406 = vpack.c.b16 %v366, %v362
    %v407 = vpack.c.b16 %v367, %v363
    %v408 = vpack.c.b16 %v368, %v364
    %v409 = vpack.c.b16 %v369, %v365
    %v410 = vpack.c.b16 %v374, %v370
    %v411 = vpack.c.b16 %v375, %v371
    %v412 = vpack.c.b16 %v376, %v372
    %v413 = vpack.c.b16 %v377, %v373
    %v414 = vpack.c.b16 %v382, %v378
    %v415 = vpack.c.b16 %v383, %v379
    %v416 = vpack.c.b16 %v384, %v380
    %v417 = vpack.c.b16 %v385, %v381
    %450 = vmatprep.subr.bf16.mxu0 %v387
    %451 = vmatpush1.bf16.msra.mxu0 %v386
    %452 = vmatprep.subr.bf16.mxu0 %v391
    %453 = vmatpush1.bf16.msra.mxu0 %v390
    %454 = vmatprep.subr.bf16.mxu0 %v395
    %455 = vmatpush1.bf16.msra.mxu0 %v394
    %456 = vmatprep.subr.bf16.mxu0 %v399
    %457 = vmatpush1.bf16.msra.mxu0 %v398
    %458 = vmatprep.subr.bf16.mxu0 %v403
    %459 = vmatpush1.bf16.msra.mxu0 %v402
    %460 = vmatprep.subr.bf16.mxu0 %v407
    %461 = vmatpush1.bf16.msra.mxu0 %v406
    %462 = vmatprep.subr.bf16.mxu0 %v411
    %463 = vmatpush1.bf16.msra.mxu0 %v410
    %464 = vmatprep.subr.bf16.mxu0 %v415
    %465 = vmatpush1.bf16.msra.mxu0 %v414
    %466 = vmatprep.subr.bf16.mxu0 0
    %467 = vmatpush1.bf16.msra.mxu0 0
    %468 = vmatprep.subr.bf16.mxu0 0
    %469 = vmatpush1.bf16.msra.mxu0 0
    %470 = vmatprep.subr.bf16.mxu0 0
    %471 = vmatpush1.bf16.msra.mxu0 0
    %472 = vmatprep.subr.bf16.mxu0 0
    %473 = vmatpush1.bf16.msra.mxu0 0
    %474 = vmatprep.subr.bf16.mxu0 0
    %475 = vmatpush1.bf16.msra.mxu0 0
    %476 = vmatprep.subr.bf16.mxu0 0
    %477 = vmatpush1.bf16.msra.mxu0 0
    %478 = vmatprep.subr.bf16.mxu0 0
    %479 = vmatpush1.bf16.msra.mxu0 0
    %480 = vmatprep.subr.bf16.mxu0 0
    %481 = vmatpush1.bf16.msra.mxu0 0
    %482 = vmatprep.mubr.bf16.mxu0 0
    %483 = vmatmul.mubr.bf16.gmra.mrb[0].mxu0 %v242
    %v484 = vpop.f32.mrb[0].mxu0
    %v485 = vadd.f32 %v129, %v484
    %v486 = vpop.f32.mrb[0].mxu0
    %v487 = vadd.f32 %v133, %v486
    %v488 = vpop.f32.mrb[0].mxu0
    %v489 = vadd.f32 %v129, %v488
    %v490 = vpop.f32.mrb[0].mxu0
    %v491 = vadd.f32 %v133, %v490
    %492 = vmatprep.mubr.bf16.mxu0 0
    %493 = vmatmul.mubr.bf16.gmra.mrb[0].mxu0 %v243
    %v494 = vpop.f32.mrb[0].mxu0
    %v495 = vadd.f32 %v129, %v494
    %v496 = vpop.f32.mrb[0].mxu0
    %v497 = vadd.f32 %v133, %v496
    %v498 = vpop.f32.mrb[0].mxu0
    %v499 = vadd.f32 %v129, %v498
    %v500 = vpop.f32.mrb[0].mxu0
    %v501 = vadd.f32 %v133, %v500
    %502 = vmatprep.mubr.bf16.mxu0 0
    %503 = vmatmul.mubr.bf16.gmra.mrb[0].mxu0 %v244
    %v504 = vpop.f32.mrb[0].mxu0
    %v505 = vadd.f32 %v129, %v504
    %v506 = vpop.f32.mrb[0].mxu0
    %v507 = vadd.f32 %v133, %v506
    %v508 = vpop.f32.mrb[0].mxu0
    %v509 = vadd.f32 %v129, %v508
    %v510 = vpop.f32.mrb[0].mxu0
    %v511 = vadd.f32 %v133, %v510
    %512 = vmatprep.mubr.bf16.mxu0 0
    %513 = vmatmul.mubr.bf16.gmra.mrb[0].mxu0 %v245
    %v514 = vpop.f32.mrb[0].mxu0
    %v515 = vadd.f32 %v129, %v514
    %v516 = vpop.f32.mrb[0].mxu0
    %v517 = vadd.f32 %v133, %v516
    %v518 = vpop.f32.mrb[0].mxu0
    %v519 = vadd.f32 %v129, %v518
    %v520 = vpop.f32.mrb[0].mxu0
    %v521 = vadd.f32 %v133, %v520
    %522 = vmatprep.mubr.bf16.mxu0 0
    %523 = vmatmul.mubr.bf16.gmra.mrb[0].mxu0 %v246
    %v524 = vpop.f32.mrb[0].mxu0
    %v525 = vadd.f32 %v129, %v524
    %v526 = vpop.f32.mrb[0].mxu0
    %v527 = vadd.f32 %v133, %v526
    %v528 = vpop.f32.mrb[0].mxu0
    %v529 = vadd.f32 %v129, %v528
    %v530 = vpop.f32.mrb[0].mxu0
    %v531 = vadd.f32 %v133, %v530
    %532 = vmatprep.mubr.bf16.mxu0 0
    %533 = vmatmul.mubr.bf16.gmra.mrb[0].mxu0 %v247
    %v534 = vpop.f32.mrb[0].mxu0
    %v535 = vadd.f32 %v129, %v534
    %v536 = vpop.f32.mrb[0].mxu0
    %v537 = vadd.f32 %v133, %v536
    %v538 = vpop.f32.mrb[0].mxu0
    %v539 = vadd.f32 %v129, %v538
    %v540 = vpop.f32.mrb[0].mxu0
    %v541 = vadd.f32 %v133, %v540
    %542 = vmatprep.mubr.bf16.mxu0 0
    %543 = vmatmul.mubr.bf16.gmra.mrb[0].mxu0 %v248
    %v544 = vpop.f32.mrb[0].mxu0
    %v545 = vadd.f32 %v129, %v544
    %v546 = vpop.f32.mrb[0].mxu0
    %v547 = vadd.f32 %v133, %v546
    %v548 = vpop.f32.mrb[0].mxu0
    %v549 = vadd.f32 %v129, %v548
    %v550 = vpop.f32.mrb[0].mxu0
    %v551 = vadd.f32 %v133, %v550
    %552 = vmatprep.mubr.bf16.mxu0 0
    %553 = vmatmul.mubr.bf16.gmra.mrb[0].mxu0 %v249
    %v554 = vpop.f32.mrb[0].mxu0
    %v555 = vadd.f32 %v129, %v554
    %v556 = vpop.f32.mrb[0].mxu0
    %v557 = vadd.f32 %v133, %v556
    %v558 = vpop.f32.mrb[0].mxu0
    %v559 = vadd.f32 %v129, %v558
    %v560 = vpop.f32.mrb[0].mxu0
    %v561 = vadd.f32 %v133, %v560
    %562 = vmatprep.mubr.bf16.mxu0 0
    %563 = vmatmul.mubr.bf16.gmra.mrb[0].mxu0 %v250
    %v564 = vpop.f32.mrb[0].mxu0
    %v565 = vadd.f32 %v129, %v564
    %v566 = vpop.f32.mrb[0].mxu0
    %v567 = vadd.f32 %v133, %v566
    %v568 = vpop.f32.mrb[0].mxu0
    %v569 = vadd.f32 %v129, %v568
    %v570 = vpop.f32.mrb[0].mxu0
    %v571 = vadd.f32 %v133, %v570
    %572 = vmatprep.mubr.bf16.mxu0 0
    %573 = vmatmul.mubr.bf16.gmra.mrb[0].mxu0 %v251
    %v574 = vpop.f32.mrb[0].mxu0
    %v575 = vadd.f32 %v129, %v574
    %v576 = vpop.f32.mrb[0].mxu0
    %v577 = vadd.f32 %v133, %v576
    %v578 = vpop.f32.mrb[0].mxu0
    %v579 = vadd.f32 %v129, %v578
    %v580 = vpop.f32.mrb[0].mxu0
    %v581 = vadd.f32 %v133, %v580
    %582 = vmatprep.mubr.bf16.mxu0 0
    %583 = vmatmul.mubr.bf16.gmra.mrb[0].mxu0 %v252
    %v584 = vpop.f32.mrb[0].mxu0
    %v585 = vadd.f32 %v129, %v584
    %v586 = vpop.f32.mrb[0].mxu0
    %v587 = vadd.f32 %v133, %v586
    %v588 = vpop.f32.mrb[0].mxu0
    %v589 = vadd.f32 %v129, %v588
    %v590 = vpop.f32.mrb[0].mxu0
    %v591 = vadd.f32 %v133, %v590
    %592 = vmatprep.mubr.bf16.mxu0 0
    %593 = vmatmul.mubr.bf16.gmra.mrb[0].mxu0 %v253
    %v594 = vpop.f32.mrb[0].mxu0
    %v595 = vadd.f32 %v129, %v594
    %v596 = vpop.f32.mrb[0].mxu0
    %v597 = vadd.f32 %v133, %v596
    %v598 = vpop.f32.mrb[0].mxu0
    %v599 = vadd.f32 %v129, %v598
    %v600 = vpop.f32.mrb[0].mxu0
    %v601 = vadd.f32 %v133, %v600
    %602 = vmatprep.mubr.bf16.mxu0 0
    %603 = vmatmul.mubr.bf16.gmra.mrb[0].mxu0 %v254
    %v604 = vpop.f32.mrb[0].mxu0
    %v605 = vadd.f32 %v129, %v604
    %v606 = vpop.f32.mrb[0].mxu0
    %v607 = vadd.f32 %v133, %v606
    %v608 = vpop.f32.mrb[0].mxu0
    %v609 = vadd.f32 %v129, %v608
    %v610 = vpop.f32.mrb[0].mxu0
    %v611 = vadd.f32 %v133, %v610
    %612 = vmatprep.mubr.bf16.mxu0 0
    %613 = vmatmul.mubr.bf16.gmra.mrb[0].mxu0 %v255
    %v614 = vpop.f32.mrb[0].mxu0
    %v615 = vadd.f32 %v129, %v614
    %v616 = vpop.f32.mrb[0].mxu0
    %v617 = vadd.f32 %v133, %v616
    %v618 = vpop.f32.mrb[0].mxu0
    %v619 = vadd.f32 %v129, %v618
    %v620 = vpop.f32.mrb[0].mxu0
    %v621 = vadd.f32 %v133, %v620
    %622 = vmatprep.mubr.bf16.mxu0 0
    %623 = vmatmul.mubr.bf16.gmra.mrb[0].mxu0 %v256
    %v624 = vpop.f32.mrb[0].mxu0
    %v625 = vadd.f32 %v129, %v624
    %v626 = vpop.f32.mrb[0].mxu0
    %v627 = vadd.f32 %v133, %v626
    %v628 = vpop.f32.mrb[0].mxu0
    %v629 = vadd.f32 %v129, %v628
    %v630 = vpop.f32.mrb[0].mxu0
    %v631 = vadd.f32 %v133, %v630
    %632 = vmatprep.mubr.bf16.mxu0 0
    %633 = vmatmul.mubr.bf16.gmra.mrb[0].mxu0 %v257
    %v634 = vpop.f32.mrb[0].mxu0
    %v635 = vadd.f32 %v129, %v634
    %v636 = vpop.f32.mrb[0].mxu0
    %v637 = vadd.f32 %v133, %v636
    %v638 = vpop.f32.mrb[0].mxu0
    %v639 = vadd.f32 %v129, %v638
    %v640 = vpop.f32.mrb[0].mxu0
    %v641 = vadd.f32 %v133, %v640
    %642 = vmatprep.mubr.bf16.mxu0 0
    %643 = vmatmul.mubr.bf16.gmra.mrb[0].mxu0 %v258
    %v644 = vpop.f32.mrb[0].mxu0
    %v645 = vadd.f32 %v129, %v644
    %v646 = vpop.f32.mrb[0].mxu0
    %v647 = vadd.f32 %v133, %v646
    %v648 = vpop.f32.mrb[0].mxu0
    %v649 = vadd.f32 %v129, %v648
    %v650 = vpop.f32.mrb[0].mxu0
    %v651 = vadd.f32 %v133, %v650
    %652 = vmatprep.mubr.bf16.mxu0 0
    %653 = vmatmul.mubr.bf16.gmra.mrb[0].mxu0 %v259
    %v654 = vpop.f32.mrb[0].mxu0
    %v655 = vadd.f32 %v129, %v654
    %v656 = vpop.f32.mrb[0].mxu0
    %v657 = vadd.f32 %v133, %v656
    %v658 = vpop.f32.mrb[0].mxu0
    %v659 = vadd.f32 %v129, %v658
    %v660 = vpop.f32.mrb[0].mxu0
    %v661 = vadd.f32 %v133, %v660
    %662 = vmatprep.mubr.bf16.mxu0 0
    %663 = vmatmul.mubr.bf16.gmra.mrb[0].mxu0 %v260
    %v664 = vpop.f32.mrb[0].mxu0
    %v665 = vadd.f32 %v129, %v664
    %v666 = vpop.f32.mrb[0].mxu0
    %v667 = vadd.f32 %v133, %v666
    %v668 = vpop.f32.mrb[0].mxu0
    %v669 = vadd.f32 %v129, %v668
    %v670 = vpop.f32.mrb[0].mxu0
    %v671 = vadd.f32 %v133, %v670
    %672 = vmatprep.mubr.bf16.mxu0 0
    %673 = vmatmul.mubr.bf16.gmra.mrb[0].mxu0 %v261
    %v674 = vpop.f32.mrb[0].mxu0
    %v675 = vadd.f32 %v129, %v674
    %v676 = vpop.f32.mrb[0].mxu0
    %v677 = vadd.f32 %v133, %v676
    %v678 = vpop.f32.mrb[0].mxu0
    %v679 = vadd.f32 %v129, %v678
    %v680 = vpop.f32.mrb[0].mxu0
    %v681 = vadd.f32 %v133, %v680
    %682 = vmatprep.mubr.bf16.mxu0 0
    %683 = vmatmul.mubr.bf16.gmra.mrb[0].mxu0 %v262
    %v684 = vpop.f32.mrb[0].mxu0
    %v685 = vadd.f32 %v129, %v684
    %v686 = vpop.f32.mrb[0].mxu0
    %v687 = vadd.f32 %v133, %v686
    %v688 = vpop.f32.mrb[0].mxu0
    %v689 = vadd.f32 %v129, %v688
    %v690 = vpop.f32.mrb[0].mxu0
    %v691 = vadd.f32 %v133, %v690
    %692 = vmatprep.mubr.bf16.mxu0 0
    %693 = vmatmul.mubr.bf16.gmra.mrb[0].mxu0 %v263
    %v694 = vpop.f32.mrb[0].mxu0
    %v695 = vadd.f32 %v129, %v694
    %v696 = vpop.f32.mrb[0].mxu0
    %v697 = vadd.f32 %v133, %v696
    %v698 = vpop.f32.mrb[0].mxu0
    %v699 = vadd.f32 %v129, %v698
    %v700 = vpop.f32.mrb[0].mxu0
    %v701 = vadd.f32 %v133, %v700
    %702 = vmatprep.mubr.bf16.mxu0 0
    %703 = vmatmul.mubr.bf16.gmra.mrb[0].mxu0 %v264
    %v704 = vpop.f32.mrb[0].mxu0
    %v705 = vadd.f32 %v129, %v704
    %v706 = vpop.f32.mrb[0].mxu0
    %v707 = vadd.f32 %v133, %v706
    %v708 = vpop.f32.mrb[0].mxu0
    %v709 = vadd.f32 %v129, %v708
    %v710 = vpop.f32.mrb[0].mxu0
    %v711 = vadd.f32 %v133, %v710
    %712 = vmatprep.mubr.bf16.mxu0 0
    %713 = vmatmul.mubr.bf16.gmra.mrb[0].mxu0 %v265
    %v714 = vpop.f32.mrb[0].mxu0
    %v715 = vadd.f32 %v129, %v714
    %v716 = vpop.f32.mrb[0].mxu0
    %v717 = vadd.f32 %v133, %v716
    %v718 = vpop.f32.mrb[0].mxu0
    %v719 = vadd.f32 %v129, %v718
    %v720 = vpop.f32.mrb[0].mxu0
    %v721 = vadd.f32 %v133, %v720
    %722 = vdwg.mxu0
    %723 = vmatprep.subr.bf16.mxu0 %v389
    %724 = vmatpush1.bf16.msra.mxu0 %v388
    %725 = vmatprep.subr.bf16.mxu0 %v393
    %726 = vmatpush1.bf16.msra.mxu0 %v392
    %727 = vmatprep.subr.bf16.mxu0 %v397
    %728 = vmatpush1.bf16.msra.mxu0 %v396
    %729 = vmatprep.subr.bf16.mxu0 %v401
    %730 = vmatpush1.bf16.msra.mxu0 %v400
    %731 = vmatprep.subr.bf16.mxu0 %v405
    %732 = vmatpush1.bf16.msra.mxu0 %v404
    %733 = vmatprep.subr.bf16.mxu0 %v409
    %734 = vmatpush1.bf16.msra.mxu0 %v408
    %735 = vmatprep.subr.bf16.mxu0 %v413
    %736 = vmatpush1.bf16.msra.mxu0 %v412
    %737 = vmatprep.subr.bf16.mxu0 %v417
    %738 = vmatpush1.bf16.msra.mxu0 %v416
    %739 = vmatprep.subr.bf16.mxu0 0
    %740 = vmatpush1.bf16.msra.mxu0 0
    %741 = vmatprep.subr.bf16.mxu0 0
    %742 = vmatpush1.bf16.msra.mxu0 0
    %743 = vmatprep.subr.bf16.mxu0 0
    %744 = vmatpush1.bf16.msra.mxu0 0
    %745 = vmatprep.subr.bf16.mxu0 0
    %746 = vmatpush1.bf16.msra.mxu0 0
    %747 = vmatprep.subr.bf16.mxu0 0
    %748 = vmatpush1.bf16.msra.mxu0 0
    %749 = vmatprep.subr.bf16.mxu0 0
    %750 = vmatpush1.bf16.msra.mxu0 0
    %751 = vmatprep.subr.bf16.mxu0 0
    %752 = vmatpush1.bf16.msra.mxu0 0
    %753 = vmatprep.subr.bf16.mxu0 0
    %754 = vmatpush1.bf16.msra.mxu0 0
    %755 = vmatprep.mubr.bf16.mxu0 0
    %756 = vmatmul.mubr.bf16.gmra.mrb[0].mxu0 %v242
    %v757 = vpop.f32.mrb[0].mxu0
    %v758 = vadd.f32 %v137, %v757
    %v759 = vpop.f32.mrb[0].mxu0
    %v760 = vadd.f32 %v141, %v759
    %v761 = vpop.f32.mrb[0].mxu0
    %v762 = vadd.f32 %v137, %v761
    %v763 = vpop.f32.mrb[0].mxu0
    %v764 = vadd.f32 %v141, %v763
    %765 = vmatprep.mubr.bf16.mxu0 0
    %766 = vmatmul.mubr.bf16.gmra.mrb[0].mxu0 %v243
    %v767 = vpop.f32.mrb[0].mxu0
    %v768 = vadd.f32 %v137, %v767
    %v769 = vpop.f32.mrb[0].mxu0
    %v770 = vadd.f32 %v141, %v769
    %v771 = vpop.f32.mrb[0].mxu0
    %v772 = vadd.f32 %v137, %v771
    %v773 = vpop.f32.mrb[0].mxu0
    %v774 = vadd.f32 %v141, %v773
    %775 = vmatprep.mubr.bf16.mxu0 0
    %776 = vmatmul.mubr.bf16.gmra.mrb[0].mxu0 %v244
    %v777 = vpop.f32.mrb[0].mxu0
    %v778 = vadd.f32 %v137, %v777
    %v779 = vpop.f32.mrb[0].mxu0
    %v780 = vadd.f32 %v141, %v779
    %v781 = vpop.f32.mrb[0].mxu0
    %v782 = vadd.f32 %v137, %v781
    %v783 = vpop.f32.mrb[0].mxu0
    %v784 = vadd.f32 %v141, %v783
    %785 = vmatprep.mubr.bf16.mxu0 0
    %786 = vmatmul.mubr.bf16.gmra.mrb[0].mxu0 %v245
    %v787 = vpop.f32.mrb[0].mxu0
    %v788 = vadd.f32 %v137, %v787
    %v789 = vpop.f32.mrb[0].mxu0
    %v790 = vadd.f32 %v141, %v789
    %v791 = vpop.f32.mrb[0].mxu0
    %v792 = vadd.f32 %v137, %v791
    %v793 = vpop.f32.mrb[0].mxu0
    %v794 = vadd.f32 %v141, %v793
    %795 = vmatprep.mubr.bf16.mxu0 0
    %796 = vmatmul.mubr.bf16.gmra.mrb[0].mxu0 %v246
    %v797 = vpop.f32.mrb[0].mxu0
    %v798 = vadd.f32 %v137, %v797
    %v799 = vpop.f32.mrb[0].mxu0
    %v800 = vadd.f32 %v141, %v799
    %v801 = vpop.f32.mrb[0].mxu0
    %v802 = vadd.f32 %v137, %v801
    %v803 = vpop.f32.mrb[0].mxu0
    %v804 = vadd.f32 %v141, %v803
    %805 = vmatprep.mubr.bf16.mxu0 0
    %806 = vmatmul.mubr.bf16.gmra.mrb[0].mxu0 %v247
    %v807 = vpop.f32.mrb[0].mxu0
    %v808 = vadd.f32 %v137, %v807
    %v809 = vpop.f32.mrb[0].mxu0
    %v810 = vadd.f32 %v141, %v809
    %v811 = vpop.f32.mrb[0].mxu0
    %v812 = vadd.f32 %v137, %v811
    %v813 = vpop.f32.mrb[0].mxu0
    %v814 = vadd.f32 %v141, %v813
    %815 = vmatprep.mubr.bf16.mxu0 0
    %816 = vmatmul.mubr.bf16.gmra.mrb[0].mxu0 %v248
    %v817 = vpop.f32.mrb[0].mxu0
    %v818 = vadd.f32 %v137, %v817
    %v819 = vpop.f32.mrb[0].mxu0
    %v820 = vadd.f32 %v141, %v819
    %v821 = vpop.f32.mrb[0].mxu0
    %v822 = vadd.f32 %v137, %v821
    %v823 = vpop.f32.mrb[0].mxu0
    %v824 = vadd.f32 %v141, %v823
    %825 = vmatprep.mubr.bf16.mxu0 0
    %826 = vmatmul.mubr.bf16.gmra.mrb[0].mxu0 %v249
    %v827 = vpop.f32.mrb[0].mxu0
    %v828 = vadd.f32 %v137, %v827
    %v829 = vpop.f32.mrb[0].mxu0
    %v830 = vadd.f32 %v141, %v829
    %v831 = vpop.f32.mrb[0].mxu0
    %v832 = vadd.f32 %v137, %v831
    %v833 = vpop.f32.mrb[0].mxu0
    %v834 = vadd.f32 %v141, %v833
    %835 = vmatprep.mubr.bf16.mxu0 0
    %836 = vmatmul.mubr.bf16.gmra.mrb[0].mxu0 %v250
    %v837 = vpop.f32.mrb[0].mxu0
    %v838 = vadd.f32 %v137, %v837
    %v839 = vpop.f32.mrb[0].mxu0
    %v840 = vadd.f32 %v141, %v839
    %v841 = vpop.f32.mrb[0].mxu0
    %v842 = vadd.f32 %v137, %v841
    %v843 = vpop.f32.mrb[0].mxu0
    %v844 = vadd.f32 %v141, %v843
    %845 = vmatprep.mubr.bf16.mxu0 0
    %846 = vmatmul.mubr.bf16.gmra.mrb[0].mxu0 %v251
    %v847 = vpop.f32.mrb[0].mxu0
    %v848 = vadd.f32 %v137, %v847
    %v849 = vpop.f32.mrb[0].mxu0
    %v850 = vadd.f32 %v141, %v849
    %v851 = vpop.f32.mrb[0].mxu0
    %v852 = vadd.f32 %v137, %v851
    %v853 = vpop.f32.mrb[0].mxu0
    %v854 = vadd.f32 %v141, %v853
    %855 = vmatprep.mubr.bf16.mxu0 0
    %856 = vmatmul.mubr.bf16.gmra.mrb[0].mxu0 %v252
    %v857 = vpop.f32.mrb[0].mxu0
    %v858 = vadd.f32 %v137, %v857
    %v859 = vpop.f32.mrb[0].mxu0
    %v860 = vadd.f32 %v141, %v859
    %v861 = vpop.f32.mrb[0].mxu0
    %v862 = vadd.f32 %v137, %v861
    %v863 = vpop.f32.mrb[0].mxu0
    %v864 = vadd.f32 %v141, %v863
    %865 = vmatprep.mubr.bf16.mxu0 0
    %866 = vmatmul.mubr.bf16.gmra.mrb[0].mxu0 %v253
    %v867 = vpop.f32.mrb[0].mxu0
    %v868 = vadd.f32 %v137, %v867
    %v869 = vpop.f32.mrb[0].mxu0
    %v870 = vadd.f32 %v141, %v869
    %v871 = vpop.f32.mrb[0].mxu0
    %v872 = vadd.f32 %v137, %v871
    %v873 = vpop.f32.mrb[0].mxu0
    %v874 = vadd.f32 %v141, %v873
    %875 = vmatprep.mubr.bf16.mxu0 0
    %876 = vmatmul.mubr.bf16.gmra.mrb[0].mxu0 %v254
    %v877 = vpop.f32.mrb[0].mxu0
    %v878 = vadd.f32 %v137, %v877
    %v879 = vpop.f32.mrb[0].mxu0
    %v880 = vadd.f32 %v141, %v879
    %v881 = vpop.f32.mrb[0].mxu0
    %v882 = vadd.f32 %v137, %v881
    %v883 = vpop.f32.mrb[0].mxu0
    %v884 = vadd.f32 %v141, %v883
    %885 = vmatprep.mubr.bf16.mxu0 0
    %886 = vmatmul.mubr.bf16.gmra.mrb[0].mxu0 %v255
    %v887 = vpop.f32.mrb[0].mxu0
    %v888 = vadd.f32 %v137, %v887
    %v889 = vpop.f32.mrb[0].mxu0
    %v890 = vadd.f32 %v141, %v889
    %v891 = vpop.f32.mrb[0].mxu0
    %v892 = vadd.f32 %v137, %v891
    %v893 = vpop.f32.mrb[0].mxu0
    %v894 = vadd.f32 %v141, %v893
    %895 = vmatprep.mubr.bf16.mxu0 0
    %896 = vmatmul.mubr.bf16.gmra.mrb[0].mxu0 %v256
    %v897 = vpop.f32.mrb[0].mxu0
    %v898 = vadd.f32 %v137, %v897
    %v899 = vpop.f32.mrb[0].mxu0
    %v900 = vadd.f32 %v141, %v899
    %v901 = vpop.f32.mrb[0].mxu0
    %v902 = vadd.f32 %v137, %v901
    %v903 = vpop.f32.mrb[0].mxu0
    %v904 = vadd.f32 %v141, %v903
    %905 = vmatprep.mubr.bf16.mxu0 0
    %906 = vmatmul.mubr.bf16.gmra.mrb[0].mxu0 %v257
    %v907 = vpop.f32.mrb[0].mxu0
    %v908 = vadd.f32 %v137, %v907
    %v909 = vpop.f32.mrb[0].mxu0
    %v910 = vadd.f32 %v141, %v909
    %v911 = vpop.f32.mrb[0].mxu0
    %v912 = vadd.f32 %v137, %v911
    %v913 = vpop.f32.mrb[0].mxu0
    %v914 = vadd.f32 %v141, %v913
    %915 = vmatprep.mubr.bf16.mxu0 0
    %916 = vmatmul.mubr.bf16.gmra.mrb[0].mxu0 %v258
    %v917 = vpop.f32.mrb[0].mxu0
    %v918 = vadd.f32 %v137, %v917
    %v919 = vpop.f32.mrb[0].mxu0
    %v920 = vadd.f32 %v141, %v919
    %v921 = vpop.f32.mrb[0].mxu0
    %v922 = vadd.f32 %v137, %v921
    %v923 = vpop.f32.mrb[0].mxu0
    %v924 = vadd.f32 %v141, %v923
    %925 = vmatprep.mubr.bf16.mxu0 0
    %926 = vmatmul.mubr.bf16.gmra.mrb[0].mxu0 %v259
    %v927 = vpop.f32.mrb[0].mxu0
    %v928 = vadd.f32 %v137, %v927
    %v929 = vpop.f32.mrb[0].mxu0
    %v930 = vadd.f32 %v141, %v929
    %v931 = vpop.f32.mrb[0].mxu0
    %v932 = vadd.f32 %v137, %v931
    %v933 = vpop.f32.mrb[0].mxu0
    %v934 = vadd.f32 %v141, %v933
    %935 = vmatprep.mubr.bf16.mxu0 0
    %936 = vmatmul.mubr.bf16.gmra.mrb[0].mxu0 %v260
    %v937 = vpop.f32.mrb[0].mxu0
    %v938 = vadd.f32 %v137, %v937
    %v939 = vpop.f32.mrb[0].mxu0
    %v940 = vadd.f32 %v141, %v939
    %v941 = vpop.f32.mrb[0].mxu0
    %v942 = vadd.f32 %v137, %v941
    %v943 = vpop.f32.mrb[0].mxu0
    %v944 = vadd.f32 %v141, %v943
    %945 = vmatprep.mubr.bf16.mxu0 0
    %946 = vmatmul.mubr.bf16.gmra.mrb[0].mxu0 %v261
    %v947 = vpop.f32.mrb[0].mxu0
    %v948 = vadd.f32 %v137, %v947
    %v949 = vpop.f32.mrb[0].mxu0
    %v950 = vadd.f32 %v141, %v949
    %v951 = vpop.f32.mrb[0].mxu0
    %v952 = vadd.f32 %v137, %v951
    %v953 = vpop.f32.mrb[0].mxu0
    %v954 = vadd.f32 %v141, %v953
    %955 = vmatprep.mubr.bf16.mxu0 0
    %956 = vmatmul.mubr.bf16.gmra.mrb[0].mxu0 %v262
    %v957 = vpop.f32.mrb[0].mxu0
    %v958 = vadd.f32 %v137, %v957
    %v959 = vpop.f32.mrb[0].mxu0
    %v960 = vadd.f32 %v141, %v959
    %v961 = vpop.f32.mrb[0].mxu0
    %v962 = vadd.f32 %v137, %v961
    %v963 = vpop.f32.mrb[0].mxu0
    %v964 = vadd.f32 %v141, %v963
    %965 = vmatprep.mubr.bf16.mxu0 0
    %966 = vmatmul.mubr.bf16.gmra.mrb[0].mxu0 %v263
    %v967 = vpop.f32.mrb[0].mxu0
    %v968 = vadd.f32 %v137, %v967
    %v969 = vpop.f32.mrb[0].mxu0
    %v970 = vadd.f32 %v141, %v969
    %v971 = vpop.f32.mrb[0].mxu0
    %v972 = vadd.f32 %v137, %v971
    %v973 = vpop.f32.mrb[0].mxu0
    %v974 = vadd.f32 %v141, %v973
    %975 = vmatprep.mubr.bf16.mxu0 0
    %976 = vmatmul.mubr.bf16.gmra.mrb[0].mxu0 %v264
    %v977 = vpop.f32.mrb[0].mxu0
    %v978 = vadd.f32 %v137, %v977
    %v979 = vpop.f32.mrb[0].mxu0
    %v980 = vadd.f32 %v141, %v979
    %v981 = vpop.f32.mrb[0].mxu0
    %v982 = vadd.f32 %v137, %v981
    %v983 = vpop.f32.mrb[0].mxu0
    %v984 = vadd.f32 %v141, %v983
    %985 = vmatprep.mubr.bf16.mxu0 0
    %986 = vmatmul.mubr.bf16.gmra.mrb[0].mxu0 %v265
    %v987 = vpop.f32.mrb[0].mxu0
    %v988 = vadd.f32 %v137, %v987
    %v989 = vpop.f32.mrb[0].mxu0
    %v990 = vadd.f32 %v141, %v989
    %v991 = vpop.f32.mrb[0].mxu0
    %v992 = vadd.f32 %v137, %v991
    %v993 = vpop.f32.mrb[0].mxu0
    %v994 = vadd.f32 %v141, %v993
    %995 = vdwg.mxu0
    %v996 = vpack.c.bf16 %v489, %v485
    %v997 = vpack.c.bf16 %v491, %v487
    %v998 = vpack.c.bf16 %v762, %v758
    %v999 = vpack.c.bf16 %v764, %v760
    %v1000 = vpack.c.bf16 %v499, %v495
    %v1001 = vpack.c.bf16 %v501, %v497
    %v1002 = vpack.c.bf16 %v772, %v768
    %v1003 = vpack.c.bf16 %v774, %v770
    %v1004 = vpack.c.bf16 %v509, %v505
    %v1005 = vpack.c.bf16 %v511, %v507
    %v1006 = vpack.c.bf16 %v782, %v778
    %v1007 = vpack.c.bf16 %v784, %v780
    %v1008 = vpack.c.bf16 %v519, %v515
    %v1009 = vpack.c.bf16 %v521, %v517
    %v1010 = vpack.c.bf16 %v792, %v788
    %v1011 = vpack.c.bf16 %v794, %v790
    %v1012 = vpack.c.bf16 %v529, %v525
    %v1013 = vpack.c.bf16 %v531, %v527
    %v1014 = vpack.c.bf16 %v802, %v798
    %v1015 = vpack.c.bf16 %v804, %v800
    %v1016 = vpack.c.bf16 %v539, %v535
    %v1017 = vpack.c.bf16 %v541, %v537
    %v1018 = vpack.c.bf16 %v812, %v808
    %v1019 = vpack.c.bf16 %v814, %v810
    %v1020 = vpack.c.bf16 %v549, %v545
    %v1021 = vpack.c.bf16 %v551, %v547
    %v1022 = vpack.c.bf16 %v822, %v818
    %v1023 = vpack.c.bf16 %v824, %v820
    %v1024 = vpack.c.bf16 %v559, %v555
    %v1025 = vpack.c.bf16 %v561, %v557
    %v1026 = vpack.c.bf16 %v832, %v828
    %v1027 = vpack.c.bf16 %v834, %v830
    %v1028 = vpack.c.bf16 %v569, %v565
    %v1029 = vpack.c.bf16 %v571, %v567
    %v1030 = vpack.c.bf16 %v842, %v838
    %v1031 = vpack.c.bf16 %v844, %v840
    %v1032 = vpack.c.bf16 %v579, %v575
    %v1033 = vpack.c.bf16 %v581, %v577
    %v1034 = vpack.c.bf16 %v852, %v848
    %v1035 = vpack.c.bf16 %v854, %v850
    %v1036 = vpack.c.bf16 %v589, %v585
    %v1037 = vpack.c.bf16 %v591, %v587
    %v1038 = vpack.c.bf16 %v862, %v858
    %v1039 = vpack.c.bf16 %v864, %v860
    %v1040 = vpack.c.bf16 %v599, %v595
    %v1041 = vpack.c.bf16 %v601, %v597
    %v1042 = vpack.c.bf16 %v872, %v868
    %v1043 = vpack.c.bf16 %v874, %v870
    %v1044 = vpack.c.bf16 %v609, %v605
    %v1045 = vpack.c.bf16 %v611, %v607
    %v1046 = vpack.c.bf16 %v882, %v878
    %v1047 = vpack.c.bf16 %v884, %v880
    %v1048 = vpack.c.bf16 %v619, %v615
    %v1049 = vpack.c.bf16 %v621, %v617
    %v1050 = vpack.c.bf16 %v892, %v888
    %v1051 = vpack.c.bf16 %v894, %v890
    %v1052 = vpack.c.bf16 %v629, %v625
    %v1053 = vpack.c.bf16 %v631, %v627
    %v1054 = vpack.c.bf16 %v902, %v898
    %v1055 = vpack.c.bf16 %v904, %v900
    %v1056 = vpack.c.bf16 %v639, %v635
    %v1057 = vpack.c.bf16 %v641, %v637
    %v1058 = vpack.c.bf16 %v912, %v908
    %v1059 = vpack.c.bf16 %v914, %v910
    %v1060 = vpack.c.bf16 %v649, %v645
    %v1061 = vpack.c.bf16 %v651, %v647
    %v1062 = vpack.c.bf16 %v922, %v918
    %v1063 = vpack.c.bf16 %v924, %v920
    %v1064 = vpack.c.bf16 %v659, %v655
    %v1065 = vpack.c.bf16 %v661, %v657
    %v1066 = vpack.c.bf16 %v932, %v928
    %v1067 = vpack.c.bf16 %v934, %v930
    %v1068 = vpack.c.bf16 %v669, %v665
    %v1069 = vpack.c.bf16 %v671, %v667
    %v1070 = vpack.c.bf16 %v942, %v938
    %v1071 = vpack.c.bf16 %v944, %v940
    %v1072 = vpack.c.bf16 %v679, %v675
    %v1073 = vpack.c.bf16 %v681, %v677
    %v1074 = vpack.c.bf16 %v952, %v948
    %v1075 = vpack.c.bf16 %v954, %v950
    %v1076 = vpack.c.bf16 %v689, %v685
    %v1077 = vpack.c.bf16 %v691, %v687
    %v1078 = vpack.c.bf16 %v962, %v958
    %v1079 = vpack.c.bf16 %v964, %v960
    %v1080 = vpack.c.bf16 %v699, %v695
    %v1081 = vpack.c.bf16 %v701, %v697
    %v1082 = vpack.c.bf16 %v972, %v968
    %v1083 = vpack.c.bf16 %v974, %v970
    %v1084 = vpack.c.bf16 %v709, %v705
    %v1085 = vpack.c.bf16 %v711, %v707
    %v1086 = vpack.c.bf16 %v982, %v978
    %v1087 = vpack.c.bf16 %v984, %v980
    %v1088 = vpack.c.bf16 %v719, %v715
    %v1089 = vpack.c.bf16 %v721, %v717
    %v1090 = vpack.c.bf16 %v992, %v988
    %v1091 = vpack.c.bf16 %v994, %v990
    %v1188 = vunpack.c.l.b16 %v996
    %v1189 = vunpack.c.l.b16 %v997
    %v1190 = vunpack.c.l.b16 %v998
    %v1191 = vunpack.c.l.b16 %v999
    %v1192 = vunpack.c.h.b16 %v996
    %v1193 = vunpack.c.h.b16 %v997
    %v1194 = vunpack.c.h.b16 %v998
    %v1195 = vunpack.c.h.b16 %v999
    %v1196 = vunpack.c.l.b16 %v1000
    %v1197 = vunpack.c.l.b16 %v1001
    %v1198 = vunpack.c.l.b16 %v1002
    %v1199 = vunpack.c.l.b16 %v1003
    %v1200 = vunpack.c.h.b16 %v1000
    %v1201 = vunpack.c.h.b16 %v1001
    %v1202 = vunpack.c.h.b16 %v1002
    %v1203 = vunpack.c.h.b16 %v1003
    %v1204 = vunpack.c.l.b16 %v1004
    %v1205 = vunpack.c.l.b16 %v1005
    %v1206 = vunpack.c.l.b16 %v1006
    %v1207 = vunpack.c.l.b16 %v1007
    %v1208 = vunpack.c.h.b16 %v1004
    %v1209 = vunpack.c.h.b16 %v1005
    %v1210 = vunpack.c.h.b16 %v1006
    %v1211 = vunpack.c.h.b16 %v1007
    %v1212 = vunpack.c.l.b16 %v1008
    %v1213 = vunpack.c.l.b16 %v1009
    %v1214 = vunpack.c.l.b16 %v1010
    %v1215 = vunpack.c.l.b16 %v1011
    %v1216 = vunpack.c.h.b16 %v1008
    %v1217 = vunpack.c.h.b16 %v1009
    %v1218 = vunpack.c.h.b16 %v1010
    %v1219 = vunpack.c.h.b16 %v1011
    %v1220 = vunpack.c.l.b16 %v1012
    %v1221 = vunpack.c.l.b16 %v1013
    %v1222 = vunpack.c.l.b16 %v1014
    %v1223 = vunpack.c.l.b16 %v1015
    %v1224 = vunpack.c.h.b16 %v1012
    %v1225 = vunpack.c.h.b16 %v1013
    %v1226 = vunpack.c.h.b16 %v1014
    %v1227 = vunpack.c.h.b16 %v1015
    %v1228 = vunpack.c.l.b16 %v1016
    %v1229 = vunpack.c.l.b16 %v1017
    %v1230 = vunpack.c.l.b16 %v1018
    %v1231 = vunpack.c.l.b16 %v1019
    %v1232 = vunpack.c.h.b16 %v1016
    %v1233 = vunpack.c.h.b16 %v1017
    %v1234 = vunpack.c.h.b16 %v1018
    %v1235 = vunpack.c.h.b16 %v1019
    %v1236 = vunpack.c.l.b16 %v1020
    %v1237 = vunpack.c.l.b16 %v1021
    %v1238 = vunpack.c.l.b16 %v1022
    %v1239 = vunpack.c.l.b16 %v1023
    %v1240 = vunpack.c.h.b16 %v1020
    %v1241 = vunpack.c.h.b16 %v1021
    %v1242 = vunpack.c.h.b16 %v1022
    %v1243 = vunpack.c.h.b16 %v1023
    %v1244 = vunpack.c.l.b16 %v1024
    %v1245 = vunpack.c.l.b16 %v1025
    %v1246 = vunpack.c.l.b16 %v1026
    %v1247 = vunpack.c.l.b16 %v1027
    %v1248 = vunpack.c.h.b16 %v1024
    %v1249 = vunpack.c.h.b16 %v1025
    %v1250 = vunpack.c.h.b16 %v1026
    %v1251 = vunpack.c.h.b16 %v1027
    %v1252 = vunpack.c.l.b16 %v1028
    %v1253 = vunpack.c.l.b16 %v1029
    %v1254 = vunpack.c.l.b16 %v1030
    %v1255 = vunpack.c.l.b16 %v1031
    %v1256 = vunpack.c.h.b16 %v1028
    %v1257 = vunpack.c.h.b16 %v1029
    %v1258 = vunpack.c.h.b16 %v1030
    %v1259 = vunpack.c.h.b16 %v1031
    %v1260 = vunpack.c.l.b16 %v1032
    %v1261 = vunpack.c.l.b16 %v1033
    %v1262 = vunpack.c.l.b16 %v1034
    %v1263 = vunpack.c.l.b16 %v1035
    %v1264 = vunpack.c.h.b16 %v1032
    %v1265 = vunpack.c.h.b16 %v1033
    %v1266 = vunpack.c.h.b16 %v1034
    %v1267 = vunpack.c.h.b16 %v1035
    %v1268 = vunpack.c.l.b16 %v1036
    %v1269 = vunpack.c.l.b16 %v1037
    %v1270 = vunpack.c.l.b16 %v1038
    %v1271 = vunpack.c.l.b16 %v1039
    %v1272 = vunpack.c.h.b16 %v1036
    %v1273 = vunpack.c.h.b16 %v1037
    %v1274 = vunpack.c.h.b16 %v1038
    %v1275 = vunpack.c.h.b16 %v1039
    %v1276 = vunpack.c.l.b16 %v1040
    %v1277 = vunpack.c.l.b16 %v1041
    %v1278 = vunpack.c.l.b16 %v1042
    %v1279 = vunpack.c.l.b16 %v1043
    %v1280 = vunpack.c.h.b16 %v1040
    %v1281 = vunpack.c.h.b16 %v1041
    %v1282 = vunpack.c.h.b16 %v1042
    %v1283 = vunpack.c.h.b16 %v1043
    %v1284 = vunpack.c.l.b16 %v1044
    %v1285 = vunpack.c.l.b16 %v1045
    %v1286 = vunpack.c.l.b16 %v1046
    %v1287 = vunpack.c.l.b16 %v1047
    %v1288 = vunpack.c.h.b16 %v1044
    %v1289 = vunpack.c.h.b16 %v1045
    %v1290 = vunpack.c.h.b16 %v1046
    %v1291 = vunpack.c.h.b16 %v1047
    %v1292 = vunpack.c.l.b16 %v1048
    %v1293 = vunpack.c.l.b16 %v1049
    %v1294 = vunpack.c.l.b16 %v1050
    %v1295 = vunpack.c.l.b16 %v1051
    %v1296 = vunpack.c.h.b16 %v1048
    %v1297 = vunpack.c.h.b16 %v1049
    %v1298 = vunpack.c.h.b16 %v1050
    %v1299 = vunpack.c.h.b16 %v1051
    %v1300 = vunpack.c.l.b16 %v1052
    %v1301 = vunpack.c.l.b16 %v1053
    %v1302 = vunpack.c.l.b16 %v1054
    %v1303 = vunpack.c.l.b16 %v1055
    %v1304 = vunpack.c.h.b16 %v1052
    %v1305 = vunpack.c.h.b16 %v1053
    %v1306 = vunpack.c.h.b16 %v1054
    %v1307 = vunpack.c.h.b16 %v1055
    %v1308 = vunpack.c.l.b16 %v1056
    %v1309 = vunpack.c.l.b16 %v1057
    %v1310 = vunpack.c.l.b16 %v1058
    %v1311 = vunpack.c.l.b16 %v1059
    %v1312 = vunpack.c.h.b16 %v1056
    %v1313 = vunpack.c.h.b16 %v1057
    %v1314 = vunpack.c.h.b16 %v1058
    %v1315 = vunpack.c.h.b16 %v1059
    %v1316 = vunpack.c.l.b16 %v1060
    %v1317 = vunpack.c.l.b16 %v1061
    %v1318 = vunpack.c.l.b16 %v1062
    %v1319 = vunpack.c.l.b16 %v1063
    %v1320 = vunpack.c.h.b16 %v1060
    %v1321 = vunpack.c.h.b16 %v1061
    %v1322 = vunpack.c.h.b16 %v1062
    %v1323 = vunpack.c.h.b16 %v1063
    %v1324 = vunpack.c.l.b16 %v1064
    %v1325 = vunpack.c.l.b16 %v1065
    %v1326 = vunpack.c.l.b16 %v1066
    %v1327 = vunpack.c.l.b16 %v1067
    %v1328 = vunpack.c.h.b16 %v1064
    %v1329 = vunpack.c.h.b16 %v1065
    %v1330 = vunpack.c.h.b16 %v1066
    %v1331 = vunpack.c.h.b16 %v1067
    %v1332 = vunpack.c.l.b16 %v1068
    %v1333 = vunpack.c.l.b16 %v1069
    %v1334 = vunpack.c.l.b16 %v1070
    %v1335 = vunpack.c.l.b16 %v1071
    %v1336 = vunpack.c.h.b16 %v1068
    %v1337 = vunpack.c.h.b16 %v1069
    %v1338 = vunpack.c.h.b16 %v1070
    %v1339 = vunpack.c.h.b16 %v1071
    %v1340 = vunpack.c.l.b16 %v1072
    %v1341 = vunpack.c.l.b16 %v1073
    %v1342 = vunpack.c.l.b16 %v1074
    %v1343 = vunpack.c.l.b16 %v1075
    %v1344 = vunpack.c.h.b16 %v1072
    %v1345 = vunpack.c.h.b16 %v1073
    %v1346 = vunpack.c.h.b16 %v1074
    %v1347 = vunpack.c.h.b16 %v1075
    %v1348 = vunpack.c.l.b16 %v1076
    %v1349 = vunpack.c.l.b16 %v1077
    %v1350 = vunpack.c.l.b16 %v1078
    %v1351 = vunpack.c.l.b16 %v1079
    %v1352 = vunpack.c.h.b16 %v1076
    %v1353 = vunpack.c.h.b16 %v1077
    %v1354 = vunpack.c.h.b16 %v1078
    %v1355 = vunpack.c.h.b16 %v1079
    %v1356 = vunpack.c.l.b16 %v1080
    %v1357 = vunpack.c.l.b16 %v1081
    %v1358 = vunpack.c.l.b16 %v1082
    %v1359 = vunpack.c.l.b16 %v1083
    %v1360 = vunpack.c.h.b16 %v1080
    %v1361 = vunpack.c.h.b16 %v1081
    %v1362 = vunpack.c.h.b16 %v1082
    %v1363 = vunpack.c.h.b16 %v1083
    %v1364 = vunpack.c.l.b16 %v1084
    %v1365 = vunpack.c.l.b16 %v1085
    %v1366 = vunpack.c.l.b16 %v1086
    %v1367 = vunpack.c.l.b16 %v1087
    %v1368 = vunpack.c.h.b16 %v1084
    %v1369 = vunpack.c.h.b16 %v1085
    %v1370 = vunpack.c.h.b16 %v1086
    %v1371 = vunpack.c.h.b16 %v1087
    %v1372 = vunpack.c.l.b16 %v1088
    %v1373 = vunpack.c.l.b16 %v1089
    %v1374 = vunpack.c.l.b16 %v1090
    %v1375 = vunpack.c.l.b16 %v1091
    %v1376 = vunpack.c.h.b16 %v1088
    %v1377 = vunpack.c.h.b16 %v1089
    %v1378 = vunpack.c.h.b16 %v1090
    %v1379 = vunpack.c.h.b16 %v1091
    %v1380 = vpack.c.b16 %v1189, %v1188
    %v1381 = vpack.c.b16 %v1191, %v1190
    %v1382 = vpack.c.b16 %v1193, %v1192
    %v1383 = vpack.c.b16 %v1195, %v1194
    %v1384 = vpack.c.b16 %v1197, %v1196
    %v1385 = vpack.c.b16 %v1199, %v1198
    %v1386 = vpack.c.b16 %v1201, %v1200
    %v1387 = vpack.c.b16 %v1203, %v1202
    %v1388 = vpack.c.b16 %v1205, %v1204
    %v1389 = vpack.c.b16 %v1207, %v1206
    %v1390 = vpack.c.b16 %v1209, %v1208
    %v1391 = vpack.c.b16 %v1211, %v1210
    %v1392 = vpack.c.b16 %v1213, %v1212
    %v1393 = vpack.c.b16 %v1215, %v1214
    %v1394 = vpack.c.b16 %v1217, %v1216
    %v1395 = vpack.c.b16 %v1219, %v1218
    %v1396 = vpack.c.b16 %v1221, %v1220
    %v1397 = vpack.c.b16 %v1223, %v1222
    %v1398 = vpack.c.b16 %v1225, %v1224
    %v1399 = vpack.c.b16 %v1227, %v1226
    %v1400 = vpack.c.b16 %v1229, %v1228
    %v1401 = vpack.c.b16 %v1231, %v1230
    %v1402 = vpack.c.b16 %v1233, %v1232
    %v1403 = vpack.c.b16 %v1235, %v1234
    %v1404 = vpack.c.b16 %v1237, %v1236
    %v1405 = vpack.c.b16 %v1239, %v1238
    %v1406 = vpack.c.b16 %v1241, %v1240
    %v1407 = vpack.c.b16 %v1243, %v1242
    %v1408 = vpack.c.b16 %v1245, %v1244
    %v1409 = vpack.c.b16 %v1247, %v1246
    %v1410 = vpack.c.b16 %v1249, %v1248
    %v1411 = vpack.c.b16 %v1251, %v1250
    %v1412 = vpack.c.b16 %v1253, %v1252
    %v1413 = vpack.c.b16 %v1255, %v1254
    %v1414 = vpack.c.b16 %v1257, %v1256
    %v1415 = vpack.c.b16 %v1259, %v1258
    %v1416 = vpack.c.b16 %v1261, %v1260
    %v1417 = vpack.c.b16 %v1263, %v1262
    %v1418 = vpack.c.b16 %v1265, %v1264
    %v1419 = vpack.c.b16 %v1267, %v1266
    %v1420 = vpack.c.b16 %v1269, %v1268
    %v1421 = vpack.c.b16 %v1271, %v1270
    %v1422 = vpack.c.b16 %v1273, %v1272
    %v1423 = vpack.c.b16 %v1275, %v1274
    %v1424 = vpack.c.b16 %v1277, %v1276
    %v1425 = vpack.c.b16 %v1279, %v1278
    %v1426 = vpack.c.b16 %v1281, %v1280
    %v1427 = vpack.c.b16 %v1283, %v1282
    %v1428 = vpack.c.b16 %v1285, %v1284
    %v1429 = vpack.c.b16 %v1287, %v1286
    %v1430 = vpack.c.b16 %v1289, %v1288
    %v1431 = vpack.c.b16 %v1291, %v1290
    %v1432 = vpack.c.b16 %v1293, %v1292
    %v1433 = vpack.c.b16 %v1295, %v1294
    %v1434 = vpack.c.b16 %v1297, %v1296
    %v1435 = vpack.c.b16 %v1299, %v1298
    %v1436 = vpack.c.b16 %v1301, %v1300
    %v1437 = vpack.c.b16 %v1303, %v1302
    %v1438 = vpack.c.b16 %v1305, %v1304
    %v1439 = vpack.c.b16 %v1307, %v1306
    %v1440 = vpack.c.b16 %v1309, %v1308
    %v1441 = vpack.c.b16 %v1311, %v1310
    %v1442 = vpack.c.b16 %v1313, %v1312
    %v1443 = vpack.c.b16 %v1315, %v1314
    %v1444 = vpack.c.b16 %v1317, %v1316
    %v1445 = vpack.c.b16 %v1319, %v1318
    %v1446 = vpack.c.b16 %v1321, %v1320
    %v1447 = vpack.c.b16 %v1323, %v1322
    %v1448 = vpack.c.b16 %v1325, %v1324
    %v1449 = vpack.c.b16 %v1327, %v1326
    %v1450 = vpack.c.b16 %v1329, %v1328
    %v1451 = vpack.c.b16 %v1331, %v1330
    %v1452 = vpack.c.b16 %v1333, %v1332
    %v1453 = vpack.c.b16 %v1335, %v1334
    %v1454 = vpack.c.b16 %v1337, %v1336
    %v1455 = vpack.c.b16 %v1339, %v1338
    %v1456 = vpack.c.b16 %v1341, %v1340
    %v1457 = vpack.c.b16 %v1343, %v1342
    %v1458 = vpack.c.b16 %v1345, %v1344
    %v1459 = vpack.c.b16 %v1347, %v1346
    %v1460 = vpack.c.b16 %v1349, %v1348
    %v1461 = vpack.c.b16 %v1351, %v1350
    %v1462 = vpack.c.b16 %v1353, %v1352
    %v1463 = vpack.c.b16 %v1355, %v1354
    %v1464 = vpack.c.b16 %v1357, %v1356
    %v1465 = vpack.c.b16 %v1359, %v1358
    %v1466 = vpack.c.b16 %v1361, %v1360
    %v1467 = vpack.c.b16 %v1363, %v1362
    %v1468 = vpack.c.b16 %v1365, %v1364
    %v1469 = vpack.c.b16 %v1367, %v1366
    %v1470 = vpack.c.b16 %v1369, %v1368
    %v1471 = vpack.c.b16 %v1371, %v1370
    %v1472 = vpack.c.b16 %v1373, %v1372
    %v1473 = vpack.c.b16 %v1375, %v1374
    %v1474 = vpack.c.b16 %v1377, %v1376
    %v1475 = vpack.c.b16 %v1379, %v1378
    %1572 = vst [vmem:[#allocation7] sm:$0xff] %v1380
    %1573 = vst [vmem:[#allocation7 + $0x8] sm:$0xff] %v1381
    %1574 = vst [vmem:[#allocation7 + $0x10] sm:$0xff] %v1382
    %1575 = vst [vmem:[#allocation7 + $0x18] sm:$0xff] %v1383
    %1576 = vst [vmem:[#allocation7 + $0x20] sm:$0xff] %v1384
    %1577 = vst [vmem:[#allocation7 + $0x28] sm:$0xff] %v1385
    %1578 = vst [vmem:[#allocation7 + $0x30] sm:$0xff] %v1386
    %1579 = vst [vmem:[#allocation7 + $0x38] sm:$0xff] %v1387
    %1580 = vst [vmem:[#allocation7 + $0x40] sm:$0xff] %v1388
    %1581 = vst [vmem:[#allocation7 + $0x48] sm:$0xff] %v1389
    %1582 = vst [vmem:[#allocation7 + $0x50] sm:$0xff] %v1390
    %1583 = vst [vmem:[#allocation7 + $0x58] sm:$0xff] %v1391
    %1584 = vst [vmem:[#allocation7 + $0x60] sm:$0xff] %v1392
    %1585 = vst [vmem:[#allocation7 + $0x68] sm:$0xff] %v1393
    %1586 = vst [vmem:[#allocation7 + $0x70] sm:$0xff] %v1394
    %1587 = vst [vmem:[#allocation7 + $0x78] sm:$0xff] %v1395
    %1588 = vst [vmem:[#allocation7 + $0x80] sm:$0xff] %v1396
    %1589 = vst [vmem:[#allocation7 + $0x88] sm:$0xff] %v1397
    %1590 = vst [vmem:[#allocation7 + $0x90] sm:$0xff] %v1398
    %1591 = vst [vmem:[#allocation7 + $0x98] sm:$0xff] %v1399
    %1592 = vst [vmem:[#allocation7 + $0xa0] sm:$0xff] %v1400
    %1593 = vst [vmem:[#allocation7 + $0xa8] sm:$0xff] %v1401
    %1594 = vst [vmem:[#allocation7 + $0xb0] sm:$0xff] %v1402
    %1595 = vst [vmem:[#allocation7 + $0xb8] sm:$0xff] %v1403
    %1596 = vst [vmem:[#allocation7 + $0xc0] sm:$0xff] %v1404
    %1597 = vst [vmem:[#allocation7 + $0xc8] sm:$0xff] %v1405
    %1598 = vst [vmem:[#allocation7 + $0xd0] sm:$0xff] %v1406
    %1599 = vst [vmem:[#allocation7 + $0xd8] sm:$0xff] %v1407
    %1600 = vst [vmem:[#allocation7 + $0xe0] sm:$0xff] %v1408
    %1601 = vst [vmem:[#allocation7 + $0xe8] sm:$0xff] %v1409
    %1602 = vst [vmem:[#allocation7 + $0xf0] sm:$0xff] %v1410
    %1603 = vst [vmem:[#allocation7 + $0xf8] sm:$0xff] %v1411
    %1604 = vst [vmem:[#allocation7 + $0x100] sm:$0xff] %v1412
    %1605 = vst [vmem:[#allocation7 + $0x108] sm:$0xff] %v1413
    %1606 = vst [vmem:[#allocation7 + $0x110] sm:$0xff] %v1414
    %1607 = vst [vmem:[#allocation7 + $0x118] sm:$0xff] %v1415
    %1608 = vst [vmem:[#allocation7 + $0x120] sm:$0xff] %v1416
    %1609 = vst [vmem:[#allocation7 + $0x128] sm:$0xff] %v1417
    %1610 = vst [vmem:[#allocation7 + $0x130] sm:$0xff] %v1418
    %1611 = vst [vmem:[#allocation7 + $0x138] sm:$0xff] %v1419
    %1612 = vst [vmem:[#allocation7 + $0x140] sm:$0xff] %v1420
    %1613 = vst [vmem:[#allocation7 + $0x148] sm:$0xff] %v1421
    %1614 = vst [vmem:[#allocation7 + $0x150] sm:$0xff] %v1422
    %1615 = vst [vmem:[#allocation7 + $0x158] sm:$0xff] %v1423
    %1616 = vst [vmem:[#allocation7 + $0x160] sm:$0xff] %v1424
    %1617 = vst [vmem:[#allocation7 + $0x168] sm:$0xff] %v1425
    %1618 = vst [vmem:[#allocation7 + $0x170] sm:$0xff] %v1426
    %1619 = vst [vmem:[#allocation7 + $0x178] sm:$0xff] %v1427
    %1620 = vst [vmem:[#allocation7 + $0x180] sm:$0xff] %v1428
    %1621 = vst [vmem:[#allocation7 + $0x188] sm:$0xff] %v1429
    %1622 = vst [vmem:[#allocation7 + $0x190] sm:$0xff] %v1430
    %1623 = vst [vmem:[#allocation7 + $0x198] sm:$0xff] %v1431
    %1624 = vst [vmem:[#allocation7 + $0x1a0] sm:$0xff] %v1432
    %1625 = vst [vmem:[#allocation7 + $0x1a8] sm:$0xff] %v1433
    %1626 = vst [vmem:[#allocation7 + $0x1b0] sm:$0xff] %v1434
    %1627 = vst [vmem:[#allocation7 + $0x1b8] sm:$0xff] %v1435
    %1628 = vst [vmem:[#allocation7 + $0x1c0] sm:$0xff] %v1436
    %1629 = vst [vmem:[#allocation7 + $0x1c8] sm:$0xff] %v1437
    %1630 = vst [vmem:[#allocation7 + $0x1d0] sm:$0xff] %v1438
    %1631 = vst [vmem:[#allocation7 + $0x1d8] sm:$0xff] %v1439
    %1632 = vst [vmem:[#allocation7 + $0x1e0] sm:$0xff] %v1440
    %1633 = vst [vmem:[#allocation7 + $0x1e8] sm:$0xff] %v1441
    %1634 = vst [vmem:[#allocation7 + $0x1f0] sm:$0xff] %v1442
    %1635 = vst [vmem:[#allocation7 + $0x1f8] sm:$0xff] %v1443
    %1636 = vst [vmem:[#allocation7 + $0x200] sm:$0xff] %v1444
    %1637 = vst [vmem:[#allocation7 + $0x208] sm:$0xff] %v1445
    %1638 = vst [vmem:[#allocation7 + $0x210] sm:$0xff] %v1446
    %1639 = vst [vmem:[#allocation7 + $0x218] sm:$0xff] %v1447
    %1640 = vst [vmem:[#allocation7 + $0x220] sm:$0xff] %v1448
    %1641 = vst [vmem:[#allocation7 + $0x228] sm:$0xff] %v1449
    %1642 = vst [vmem:[#allocation7 + $0x230] sm:$0xff] %v1450
    %1643 = vst [vmem:[#allocation7 + $0x238] sm:$0xff] %v1451
    %1644 = vst [vmem:[#allocation7 + $0x240] sm:$0xff] %v1452
    %1645 = vst [vmem:[#allocation7 + $0x248] sm:$0xff] %v1453
    %1646 = vst [vmem:[#allocation7 + $0x250] sm:$0xff] %v1454
    %1647 = vst [vmem:[#allocation7 + $0x258] sm:$0xff] %v1455
    %1648 = vst [vmem:[#allocation7 + $0x260] sm:$0xff] %v1456
    %1649 = vst [vmem:[#allocation7 + $0x268] sm:$0xff] %v1457
    %1650 = vst [vmem:[#allocation7 + $0x270] sm:$0xff] %v1458
    %1651 = vst [vmem:[#allocation7 + $0x278] sm:$0xff] %v1459
    %1652 = vst [vmem:[#allocation7 + $0x280] sm:$0xff] %v1460
    %1653 = vst [vmem:[#allocation7 + $0x288] sm:$0xff] %v1461
    %1654 = vst [vmem:[#allocation7 + $0x290] sm:$0xff] %v1462
    %1655 = vst [vmem:[#allocation7 + $0x298] sm:$0xff] %v1463
    %1656 = vst [vmem:[#allocation7 + $0x2a0] sm:$0xff] %v1464
    %1657 = vst [vmem:[#allocation7 + $0x2a8] sm:$0xff] %v1465
    %1658 = vst [vmem:[#allocation7 + $0x2b0] sm:$0xff] %v1466
    %1659 = vst [vmem:[#allocation7 + $0x2b8] sm:$0xff] %v1467
    %1660 = vst [vmem:[#allocation7 + $0x2c0] sm:$0xff] %v1468
    %1661 = vst [vmem:[#allocation7 + $0x2c8] sm:$0xff] %v1469
    %1662 = vst [vmem:[#allocation7 + $0x2d0] sm:$0xff] %v1470
    %1663 = vst [vmem:[#allocation7 + $0x2d8] sm:$0xff] %v1471
    %1664 = vst [vmem:[#allocation7 + $0x2e0] sm:$0xff] %v1472
    %1665 = vst [vmem:[#allocation7 + $0x2e8] sm:$0xff] %v1473
    %1666 = vst [vmem:[#allocation7 + $0x2f0] sm:$0xff] %v1474
    %1667 = vst [vmem:[#allocation7 + $0x2f8] sm:$0xff] %v1475
    // Predicated region
    $region22: #{tpu_custom_call.1} parent=1 // pred_check
      _
    $region23: #{tpu_custom_call.1} parent=1 // pred_check_branch
      %1669 = sbr.rel (0) target = $region25
    $region24: #{tpu_custom_call.1} parent=1 // pred_region
      %s1671 = ssub.s32 12288, 12288
      %1672 = vsyncadd [#allocation4], %s1671
      %s1673 = sshll.u32 [#allocation7], 4
      %s1674 = int_to_ptr.vmem [resolvable:$true] %s1673
      %1679 = dma.vmem_to_hbm [thread:$0]  %s1674, 12288, %s3, [#allocation4], 256, 256, 16
    $region25: #{tpu_custom_call.1} parent=1 // pred_fallthru
      _
    // Predicated region
    $region26: #{tpu_custom_call.1} parent=1 // pred_check
      _
    $region27: #{tpu_custom_call.1} parent=1 // pred_check_branch
      %1681 = sbr.rel (0) target = $region29
    $region28: #{tpu_custom_call.1} parent=1 // pred_region
      %1682 = dma.done [#allocation4], 12288
    $region29: #{tpu_custom_call.1} parent=1 // pred_fallthru
      _
    %1683 = vsyncpa [#allocation3], 1
    %1684 = vsyncpa [#allocation6], 1
    %1685 = vsyncpa [#allocation4], 1

</llo_original>
